<compile_context>
chip_gen: v7x
topology: tpu7x:2x2x1
jax: 0.10.0
libtpu: 0.0.40
codegen_flags: <defaults>
</compile_context>

<pallas_src>
import functools
import math

import numpy as np
import jax
import jax.numpy as jnp
from jax.experimental import pallas as pl
from jax.experimental.pallas import tpu as pltpu


# ----------------------------------------------------------------------------
# Deterministic constants (plain numpy, baked into the kernels at trace time)
# ----------------------------------------------------------------------------

SOBEL_X = (np.array([[-1.0, 0.0, 1.0],
                     [-2.0, 0.0, 2.0],
                     [-1.0, 0.0, 1.0]], dtype=np.float32) / 8.0)
SOBEL_Y = SOBEL_X.T.copy()


def make_gabor_bank(theta_size: int, ksize: int, c_in: int) -> np.ndarray:
    """Real Gabor filters, one orientation per output channel, averaged over inputs.

    Returns weights of shape [theta_size, c_in, ksize, ksize].
    """
    half = (ksize - 1) / 2.0
    ys, xs = np.meshgrid(np.arange(ksize) - half, np.arange(ksize) - half, indexing="ij")
    sigma, gamma, lam, psi = 1.0, 0.5, 2.0, 0.0
    bank = np.zeros((theta_size, c_in, ksize, ksize), np.float32)
    for t in range(theta_size):
        theta = math.pi * t / theta_size
        xp = xs * math.cos(theta) + ys * math.sin(theta)
        yp = -xs * math.sin(theta) + ys * math.cos(theta)
        g = np.exp(-(xp ** 2 + (gamma ** 2) * yp ** 2) / (2.0 * sigma ** 2)) \
            * np.cos(2.0 * math.pi * xp / lam + psi)
        bank[t] = (g[None, :, :] / float(c_in)).astype(np.float32)
    return bank


def bilinear_matrix(out_size: int, in_size: int) -> np.ndarray:
    """Row-interpolation matrix matching F.interpolate(mode='bilinear', align_corners=False)."""
    M = np.zeros((out_size, in_size), np.float32)
    if in_size == 1:
        M[:, 0] = 1.0
        return M
    scale = in_size / out_size
    for o in range(out_size):
        x = (o + 0.5) * scale - 0.5
        x = max(x, 0.0)
        i0 = min(int(math.floor(x)), in_size - 1)
        i1 = min(i0 + 1, in_size - 1)
        frac = x - i0
        M[o, i0] += 1.0 - frac
        M[o, i1] += frac
    return M


# ----------------------------------------------------------------------------
# Pallas kernels
# ----------------------------------------------------------------------------

def _fusion_kernel(ab_ref, img_ref, out_ref, pad_ref, *, H, W, C, T,
                   gabor, sobel_x, sobel_y):
    """Per-batch: Gabor 3x3 bank (C->T) + Sobel gradient magnitude (->1 channel),
    scaled by alpha/beta, written channel-wise into the [T+1, H, W] output.

    ab_ref:  SMEM [2]           (alpha, beta)
    img_ref: VMEM [1, C, H, W]  input image (NCHW, W on lanes)
    out_ref: VMEM [1, T+1, H, W]
    pad_ref: VMEM [C, H+2, W+2] scratch (zero halo, interior rewritten per step)
    """
    # Border stays zero across grid steps; zero the whole scratch only once.
    @pl.when(pl.program_id(0) == 0)
    def _():
        pad_ref[...] = jnp.zeros_like(pad_ref)

    for c in range(C):
        pad_ref[c, 1:H + 1, 1:W + 1] = img_ref[0, c]

    alpha = ab_ref[0]
    beta = ab_ref[1]

    gab = [jnp.zeros((H, W), jnp.float32) for _ in range(T)]
    grad_acc = jnp.zeros((H, W), jnp.float32)

    # All taps are VPU FMAs with baked scalar weights (no MXU, no reshapes).
    for c in range(C):
        gx = jnp.zeros((H, W), jnp.float32)
        gy = jnp.zeros((H, W), jnp.float32)
        for dy in range(3):
            for dx in range(3):
                patch = pad_ref[c, dy:dy + H, dx:dx + W]          # [H, W]
                sx = float(sobel_x[dy, dx])
                sy = float(sobel_y[dy, dx])
                if sx != 0.0:
                    gx = gx + sx * patch
                if sy != 0.0:
                    gy = gy + sy * patch
                for t in range(T):
                    w = float(gabor[t, c, dy, dx])
                    if w != 0.0:
                        gab[t] = gab[t] + w * patch
        grad_acc = grad_acc + jnp.sqrt(gx * gx + gy * gy + 1e-12)

    inv_c = 1.0 / float(C)
    for t in range(T):
        out_ref[0, t] = alpha * gab[t]
    out_ref[0, T] = beta * (grad_acc * inv_c)


def _attn_kernel(wab_ref, fm_ref, fus_ref, wh_ref, wwT_ref, outf_ref, outa_ref,
                 *, Hf, Wf, H, W, C2, Fc):
    """Per-batch: separable bilinear resize, 1x1 conv -> sigmoid attention, gating.

    wab_ref:  SMEM [Fc+C2+1]     attention 1x1 weights (Fc then C2) + bias
    fm_ref:   VMEM [1, Fc, Hf, Wf]
    fus_ref:  VMEM [1, C2, H, W]
    wh_ref:   VMEM [Hf, H]       row-interp matrix
    wwT_ref:  VMEM [W, Wf]       column-interp matrix (pre-transposed)
    outf_ref: VMEM [1, Fc+C2, Hf, Wf] gated features
    outa_ref: VMEM [1, 1, Hf, Wf]     attention map
    """
    wh = wh_ref[...]
    wwT = wwT_ref[...]

    # Separable bilinear resize: Wh @ fus[c] @ Ww^T (replaces dense kron matrix).
    resized = []
    for c in range(C2):
        rc = jnp.dot(fus_ref[0, c], wwT, preferred_element_type=jnp.float32)  # [H, Wf]
        rc = jnp.dot(wh, rc, preferred_element_type=jnp.float32)              # [Hf, Wf]
        resized.append(rc)

    # 1x1 attention conv on the VPU: scalar-weight FMAs over channel slices.
    logits = jnp.full((Hf, Wf), wab_ref[Fc + C2], jnp.float32)                # bias
    for c in range(Fc):
        logits = logits + wab_ref[c] * fm_ref[0, c]
    for c in range(C2):
        logits = logits + wab_ref[Fc + c] * resized[c]
    att = jax.nn.sigmoid(logits)

    # Gate and write both halves straight into the output ref (no concat).
    for c in range(Fc):
        outf_ref[0, c] = fm_ref[0, c] * att
    for c in range(C2):
        outf_ref[0, Fc + c] = resized[c] * att
    outa_ref[0, 0] = att


# ----------------------------------------------------------------------------
# Wrapper (parameter setup + pallas_call plumbing)
# ----------------------------------------------------------------------------

class TANetPallas:
    def __init__(self, f_in, C_in, kernel_sizes=(3,), theta_size=4, key=None):
        assert tuple(kernel_sizes) == (3,), "this synthetic port implements kernel_sizes=[3]"
        self.f_in = f_in
        self.C_in = C_in
        self.theta_size = theta_size
        self.alpha = 1.0 / len(kernel_sizes)         # Parameter init: 1/len(kernel_sizes)
        self.beta = 1.0                              # Parameter init: 1.0
        self.gabor = make_gabor_bank(theta_size, 3, C_in)   # np [T, C, 3, 3], baked constant
        self.c_tot = f_in + 1 + theta_size
        if key is None:
            key = jax.random.PRNGKey(0)
        bound = 1.0 / math.sqrt(self.c_tot)
        wa = jax.random.uniform(key, (self.c_tot,), jnp.float32, -bound, bound)
        self.wab = jnp.concatenate([wa, jnp.zeros((1,), jnp.float32)])   # weights + bias
        self._resize_cache = {}

    def _resize_mats(self, Hf, H, Wf, W):
        key = (Hf, H, Wf, W)
        if key not in self._resize_cache:
            wh = jnp.asarray(bilinear_matrix(Hf, H))              # [Hf, H]
            wwT = jnp.asarray(bilinear_matrix(Wf, W).T.copy())    # [W, Wf]
            self._resize_cache[key] = (wh, wwT)
        return self._resize_cache[key]

    def __call__(self, feature_map_nchw, img_nchw):
        N, Fc, Hf, Wf = feature_map_nchw.shape
        Ni, C, H, W = img_nchw.shape
        assert N == Ni and Fc == self.f_in and C == self.C_in
        T = self.theta_size
        C2 = T + 1
        Ct = self.c_tot

        fm = feature_map_nchw.astype(jnp.float32)
        img = img_nchw.astype(jnp.float32)
        ab = jnp.asarray([self.alpha, self.beta], jnp.float32)

        # ---- kernel 1: Gabor conv + gradient + alpha/beta scaling ----------------
        # NCHW in / NCHW out (W lane-dense); halo padding done in a VMEM scratch so
        # the wrapper never re-streams the image through HBM.
        # TODO(synk): for large H*W on v7x (64 MiB VMEM) add a row-tiled grid with a
        # 2-row halo via manual DMA; unnecessary at these shapes.
        fusion = pl.pallas_call(
            functools.partial(_fusion_kernel, H=H, W=W, C=C, T=T,
                              gabor=self.gabor, sobel_x=SOBEL_X, sobel_y=SOBEL_Y),
            out_shape=jax.ShapeDtypeStruct((N, C2, H, W), jnp.float32),
            grid=(N,),
            in_specs=[
                pl.BlockSpec(memory_space=pltpu.MemorySpace.SMEM),          # (alpha, beta)
                pl.BlockSpec((1, C, H, W), lambda n: (n, 0, 0, 0)),
            ],
            out_specs=pl.BlockSpec((1, C2, H, W), lambda n: (n, 0, 0, 0)),
            scratch_shapes=[pltpu.VMEM((C, H + 2, W + 2), jnp.float32)],
            compiler_params=pltpu.CompilerParams(dimension_semantics=("parallel",)),
        )(ab, img)

        wh, wwT = self._resize_mats(Hf, H, Wf, W)

        # ---- kernel 2: separable upsample + 1x1 conv attention + gating ----------
        out_f, out_a = pl.pallas_call(
            functools.partial(_attn_kernel, Hf=Hf, Wf=Wf, H=H, W=W, C2=C2, Fc=Fc),
            out_shape=(jax.ShapeDtypeStruct((N, Ct, Hf, Wf), jnp.float32),
                       jax.ShapeDtypeStruct((N, 1, Hf, Wf), jnp.float32)),
            grid=(N,),
            in_specs=[
                pl.BlockSpec(memory_space=pltpu.MemorySpace.SMEM),          # wa + bias
                pl.BlockSpec((1, Fc, Hf, Wf), lambda n: (n, 0, 0, 0)),
                pl.BlockSpec((1, C2, H, W), lambda n: (n, 0, 0, 0)),
                pl.BlockSpec((Hf, H), lambda n: (0, 0)),
                pl.BlockSpec((W, Wf), lambda n: (0, 0)),
            ],
            out_specs=(pl.BlockSpec((1, Ct, Hf, Wf), lambda n: (n, 0, 0, 0)),
                       pl.BlockSpec((1, 1, Hf, Wf), lambda n: (n, 0, 0, 0))),
            compiler_params=pltpu.CompilerParams(dimension_semantics=("parallel",)),
        )(self.wab, fm, fusion, wh, wwT)

        # Outputs are already NCHW — no wrapper-side transpose needed.
        return out_f, out_a


# ----------------------------------------------------------------------------
# Example run
# ----------------------------------------------------------------------------

if __name__ == "__main__":
    key = jax.random.PRNGKey(0)
    k_fm, k_img, k_w = jax.random.split(key, 3)

    f_in, C_in, theta_size = 4, 3, 4
    N, H, W = 2, 16, 16          # input image resolution
    Hf, Wf = 8, 8                # feature-map resolution (upsample target)

    feature_map = jax.random.normal(k_fm, (N, f_in, Hf, Wf), jnp.float32)   # NCHW
    img = jax.random.uniform(k_img, (N, C_in, H, W), jnp.float32)           # NCHW

    net = TANetPallas(f_in=f_in, C_in=C_in, kernel_sizes=(3,), theta_size=theta_size, key=k_w)
    out_feat, att_map = net(feature_map, img)
    out_feat, att_map = jax.block_until_ready((out_feat, att_map))

    assert out_feat.shape == (N, f_in + 1 + theta_size, Hf, Wf), out_feat.shape
    assert att_map.shape == (N, 1, Hf, Wf), att_map.shape
    assert bool(jnp.all(jnp.isfinite(out_feat))) and bool(jnp.all(jnp.isfinite(att_map)))
    print("KERNEL_OK")
</pallas_src>

<mosaic_0001>
module attributes {stable_mosaic.version = 11 : i64} {
  func.func @_fusion_kernel(%arg0: i32, %arg1: memref<2xf32, #tpu.memory_space<smem>>, %arg2: memref<1x3x16x16xf32, #tpu.memory_space<vmem>>, %arg3: memref<1x5x16x16xf32, #tpu.memory_space<vmem>>, %arg4: memref<3x18x18xf32, #tpu.memory_space<vmem>>) attributes {dimension_semantics = [#tpu.dimension_semantics<parallel>], iteration_bounds = array<i64: 2>, scalar_prefetch = 0 : i64, scratch_operands = 1 : i64, tpu.core_type = #tpu.core_type<tc>, window_params = [{transform_indices = @transform_0, window_bounds = array<i64: 2>}, {transform_indices = @transform_1, window_bounds = array<i64: 1, 3, 16, 16>}, {transform_indices = @transform_2, window_bounds = array<i64: 1, 5, 16, 16>}]} {
    %c0_i32 = arith.constant 0 : i32
    %0 = arith.cmpi eq, %arg0, %c0_i32 : i32
    %1 = arith.extui %0 : i1 to i32
    %c0_i32_0 = arith.constant 0 : i32
    %2 = arith.cmpi ne, %1, %c0_i32_0 : i32
    scf.if %2 {
      %cst_278 = arith.constant 0.000000e+00 : f32
      %565 = vector.broadcast %cst_278 : f32 to vector<3x18x18xf32>
      %c0_279 = arith.constant 0 : index
      %c0_280 = arith.constant 0 : index
      %c0_281 = arith.constant 0 : index
      %566 = vector.load %arg4[%c0_279, %c0_280, %c0_281] : memref<3x18x18xf32, #tpu.memory_space<vmem>>, vector<3x18x18xf32>
      tpu.vector_store %arg4[%c0_279, %c0_280, %c0_281], %565 {strides = array<i32>} : memref<3x18x18xf32, #tpu.memory_space<vmem>>, vector<3x18x18xf32>,
    } else {
    }
    %c0 = arith.constant 0 : index
    %c0_1 = arith.constant 0 : index
    %c0_2 = arith.constant 0 : index
    %c0_3 = arith.constant 0 : index
    %3 = vector.load %arg2[%c0, %c0_1, %c0_2, %c0_3] : memref<1x3x16x16xf32, #tpu.memory_space<vmem>>, vector<1x1x16x16xf32>
    %4 = vector.shape_cast %3 : vector<1x1x16x16xf32> to vector<16x16xf32>
    %c0_4 = arith.constant 0 : index
    %c1 = arith.constant 1 : index
    %c1_5 = arith.constant 1 : index
    %5 = vector.load %arg4[%c0_4, %c1, %c1_5] : memref<3x18x18xf32, #tpu.memory_space<vmem>>, vector<1x16x16xf32>
    %6 = vector.shape_cast %5 : vector<1x16x16xf32> to vector<16x16xf32>
    %7 = vector.shape_cast %4 : vector<16x16xf32> to vector<1x16x16xf32>
    tpu.vector_store %arg4[%c0_4, %c1, %c1_5], %7 {strides = array<i32>} : memref<3x18x18xf32, #tpu.memory_space<vmem>>, vector<1x16x16xf32>,
    %c0_6 = arith.constant 0 : index
    %c1_7 = arith.constant 1 : index
    %c0_8 = arith.constant 0 : index
    %c0_9 = arith.constant 0 : index
    %8 = vector.load %arg2[%c0_6, %c1_7, %c0_8, %c0_9] : memref<1x3x16x16xf32, #tpu.memory_space<vmem>>, vector<1x1x16x16xf32>
    %9 = vector.shape_cast %8 : vector<1x1x16x16xf32> to vector<16x16xf32>
    %c1_10 = arith.constant 1 : index
    %c1_11 = arith.constant 1 : index
    %c1_12 = arith.constant 1 : index
    %10 = vector.load %arg4[%c1_10, %c1_11, %c1_12] : memref<3x18x18xf32, #tpu.memory_space<vmem>>, vector<1x16x16xf32>
    %11 = vector.shape_cast %10 : vector<1x16x16xf32> to vector<16x16xf32>
    %12 = vector.shape_cast %9 : vector<16x16xf32> to vector<1x16x16xf32>
    tpu.vector_store %arg4[%c1_10, %c1_11, %c1_12], %12 {strides = array<i32>} : memref<3x18x18xf32, #tpu.memory_space<vmem>>, vector<1x16x16xf32>,
    %c0_13 = arith.constant 0 : index
    %c2 = arith.constant 2 : index
    %c0_14 = arith.constant 0 : index
    %c0_15 = arith.constant 0 : index
    %13 = vector.load %arg2[%c0_13, %c2, %c0_14, %c0_15] : memref<1x3x16x16xf32, #tpu.memory_space<vmem>>, vector<1x1x16x16xf32>
    %14 = vector.shape_cast %13 : vector<1x1x16x16xf32> to vector<16x16xf32>
    %c2_16 = arith.constant 2 : index
    %c1_17 = arith.constant 1 : index
    %c1_18 = arith.constant 1 : index
    %15 = vector.load %arg4[%c2_16, %c1_17, %c1_18] : memref<3x18x18xf32, #tpu.memory_space<vmem>>, vector<1x16x16xf32>
    %16 = vector.shape_cast %15 : vector<1x16x16xf32> to vector<16x16xf32>
    %17 = vector.shape_cast %14 : vector<16x16xf32> to vector<1x16x16xf32>
    tpu.vector_store %arg4[%c2_16, %c1_17, %c1_18], %17 {strides = array<i32>} : memref<3x18x18xf32, #tpu.memory_space<vmem>>, vector<1x16x16xf32>,
    %c0_19 = arith.constant 0 : index
    %18 = memref.load %arg1[%c0_19] : memref<2xf32, #tpu.memory_space<smem>>
    %c1_20 = arith.constant 1 : index
    %19 = memref.load %arg1[%c1_20] : memref<2xf32, #tpu.memory_space<smem>>
    %cst = arith.constant 0.000000e+00 : f32
    %20 = vector.broadcast %cst : f32 to vector<16x16xf32>
    %cst_21 = arith.constant 0.000000e+00 : f32
    %21 = vector.broadcast %cst_21 : f32 to vector<16x16xf32>
    %cst_22 = arith.constant 0.000000e+00 : f32
    %22 = vector.broadcast %cst_22 : f32 to vector<16x16xf32>
    %cst_23 = arith.constant 0.000000e+00 : f32
    %23 = vector.broadcast %cst_23 : f32 to vector<16x16xf32>
    %cst_24 = arith.constant 0.000000e+00 : f32
    %24 = vector.broadcast %cst_24 : f32 to vector<16x16xf32>
    %cst_25 = arith.constant 0.000000e+00 : f32
    %25 = vector.broadcast %cst_25 : f32 to vector<16x16xf32>
    %cst_26 = arith.constant 0.000000e+00 : f32
    %26 = vector.broadcast %cst_26 : f32 to vector<16x16xf32>
    %c0_27 = arith.constant 0 : index
    %c0_28 = arith.constant 0 : index
    %c0_29 = arith.constant 0 : index
    %27 = vector.load %arg4[%c0_27, %c0_28, %c0_29] : memref<3x18x18xf32, #tpu.memory_space<vmem>>, vector<1x16x16xf32>
    %28 = vector.shape_cast %27 : vector<1x16x16xf32> to vector<16x16xf32>
    %cst_30 = arith.constant -1.250000e-01 : f32
    %29 = vector.broadcast %cst_30 : f32 to vector<16x16xf32>
    %30 = arith.mulf %29, %28 : vector<16x16xf32>
    %31 = arith.addf %25, %30 : vector<16x16xf32>
    %cst_31 = arith.constant -1.250000e-01 : f32
    %32 = vector.broadcast %cst_31 : f32 to vector<16x16xf32>
    %33 = arith.mulf %32, %28 : vector<16x16xf32>
    %34 = arith.addf %26, %33 : vector<16x16xf32>
    %cst_32 = arith.constant -0.178420469 : f32
    %35 = vector.broadcast %cst_32 : f32 to vector<16x16xf32>
    %36 = arith.mulf %35, %28 : vector<16x16xf32>
    %37 = arith.addf %20, %36 : vector<16x16xf32>
    %cst_33 = arith.constant -0.0326499566 : f32
    %38 = vector.broadcast %cst_33 : f32 to vector<16x16xf32>
    %39 = arith.mulf %38, %28 : vector<16x16xf32>
    %40 = arith.addf %21, %39 : vector<16x16xf32>
    %cst_34 = arith.constant -0.178420469 : f32
    %41 = vector.broadcast %cst_34 : f32 to vector<16x16xf32>
    %42 = arith.mulf %41, %28 : vector<16x16xf32>
    %43 = arith.addf %22, %42 : vector<16x16xf32>
    %cst_35 = arith.constant 0.259600252 : f32
    %44 = vector.broadcast %cst_35 : f32 to vector<16x16xf32>
    %45 = arith.mulf %44, %28 : vector<16x16xf32>
    %46 = arith.addf %23, %45 : vector<16x16xf32>
    %c0_36 = arith.constant 0 : index
    %c0_37 = arith.constant 0 : index
    %c1_38 = arith.constant 1 : index
    %47 = vector.load %arg4[%c0_36, %c0_37, %c1_38] : memref<3x18x18xf32, #tpu.memory_space<vmem>>, vector<1x16x16xf32>
    %48 = vector.shape_cast %47 : vector<1x16x16xf32> to vector<16x16xf32>
    %cst_39 = arith.constant -2.500000e-01 : f32
    %49 = vector.broadcast %cst_39 : f32 to vector<16x16xf32>
    %50 = arith.mulf %49, %48 : vector<16x16xf32>
    %51 = arith.addf %34, %50 : vector<16x16xf32>
    %cst_40 = arith.constant 0.294165641 : f32
    %52 = vector.broadcast %cst_40 : f32 to vector<16x16xf32>
    %53 = arith.mulf %52, %48 : vector<16x16xf32>
    %54 = arith.addf %37, %53 : vector<16x16xf32>
    %cst_41 = arith.constant -0.147713169 : f32
    %55 = vector.broadcast %cst_41 : f32 to vector<16x16xf32>
    %56 = arith.mulf %55, %48 : vector<16x16xf32>
    %57 = arith.addf %40, %56 : vector<16x16xf32>
    %cst_42 = arith.constant -0.202176884 : f32
    %58 = vector.broadcast %cst_42 : f32 to vector<16x16xf32>
    %59 = arith.mulf %58, %48 : vector<16x16xf32>
    %60 = arith.addf %43, %59 : vector<16x16xf32>
    %cst_43 = arith.constant -0.147713169 : f32
    %61 = vector.broadcast %cst_43 : f32 to vector<16x16xf32>
    %62 = arith.mulf %61, %48 : vector<16x16xf32>
    %63 = arith.addf %46, %62 : vector<16x16xf32>
    %c0_44 = arith.constant 0 : index
    %c0_45 = arith.constant 0 : index
    %c2_46 = arith.constant 2 : index
    %64 = vector.load %arg4[%c0_44, %c0_45, %c2_46] : memref<3x18x18xf32, #tpu.memory_space<vmem>>, vector<1x16x16xf32>
    %65 = vector.shape_cast %64 : vector<1x16x16xf32> to vector<16x16xf32>
    %cst_47 = arith.constant 1.250000e-01 : f32
    %66 = vector.broadcast %cst_47 : f32 to vector<16x16xf32>
    %67 = arith.mulf %66, %65 : vector<16x16xf32>
    %68 = arith.addf %31, %67 : vector<16x16xf32>
    %cst_48 = arith.constant -1.250000e-01 : f32
    %69 = vector.broadcast %cst_48 : f32 to vector<16x16xf32>
    %70 = arith.mulf %69, %65 : vector<16x16xf32>
    %71 = arith.addf %51, %70 : vector<16x16xf32>
    %cst_49 = arith.constant -0.178420469 : f32
    %72 = vector.broadcast %cst_49 : f32 to vector<16x16xf32>
    %73 = arith.mulf %72, %65 : vector<16x16xf32>
    %74 = arith.addf %54, %73 : vector<16x16xf32>
    %cst_50 = arith.constant 0.259600252 : f32
    %75 = vector.broadcast %cst_50 : f32 to vector<16x16xf32>
    %76 = arith.mulf %75, %65 : vector<16x16xf32>
    %77 = arith.addf %57, %76 : vector<16x16xf32>
    %cst_51 = arith.constant -0.178420469 : f32
    %78 = vector.broadcast %cst_51 : f32 to vector<16x16xf32>
    %79 = arith.mulf %78, %65 : vector<16x16xf32>
    %80 = arith.addf %60, %79 : vector<16x16xf32>
    %cst_52 = arith.constant -0.0326499566 : f32
    %81 = vector.broadcast %cst_52 : f32 to vector<16x16xf32>
    %82 = arith.mulf %81, %65 : vector<16x16xf32>
    %83 = arith.addf %63, %82 : vector<16x16xf32>
    %c0_53 = arith.constant 0 : index
    %c1_54 = arith.constant 1 : index
    %c0_55 = arith.constant 0 : index
    %84 = vector.load %arg4[%c0_53, %c1_54, %c0_55] : memref<3x18x18xf32, #tpu.memory_space<vmem>>, vector<1x16x16xf32>
    %85 = vector.shape_cast %84 : vector<1x16x16xf32> to vector<16x16xf32>
    %cst_56 = arith.constant -2.500000e-01 : f32
    %86 = vector.broadcast %cst_56 : f32 to vector<16x16xf32>
    %87 = arith.mulf %86, %85 : vector<16x16xf32>
    %88 = arith.addf %68, %87 : vector<16x16xf32>
    %cst_57 = arith.constant -0.202176884 : f32
    %89 = vector.broadcast %cst_57 : f32 to vector<16x16xf32>
    %90 = arith.mulf %89, %85 : vector<16x16xf32>
    %91 = arith.addf %74, %90 : vector<16x16xf32>
    %cst_58 = arith.constant -0.147713169 : f32
    %92 = vector.broadcast %cst_58 : f32 to vector<16x16xf32>
    %93 = arith.mulf %92, %85 : vector<16x16xf32>
    %94 = arith.addf %77, %93 : vector<16x16xf32>
    %cst_59 = arith.constant 0.294165641 : f32
    %95 = vector.broadcast %cst_59 : f32 to vector<16x16xf32>
    %96 = arith.mulf %95, %85 : vector<16x16xf32>
    %97 = arith.addf %80, %96 : vector<16x16xf32>
    %cst_60 = arith.constant -0.147713169 : f32
    %98 = vector.broadcast %cst_60 : f32 to vector<16x16xf32>
    %99 = arith.mulf %98, %85 : vector<16x16xf32>
    %100 = arith.addf %83, %99 : vector<16x16xf32>
    %c0_61 = arith.constant 0 : index
    %c1_62 = arith.constant 1 : index
    %c1_63 = arith.constant 1 : index
    %101 = vector.load %arg4[%c0_61, %c1_62, %c1_63] : memref<3x18x18xf32, #tpu.memory_space<vmem>>, vector<1x16x16xf32>
    %102 = vector.shape_cast %101 : vector<1x16x16xf32> to vector<16x16xf32>
    %cst_64 = arith.constant 0.333333343 : f32
    %103 = vector.broadcast %cst_64 : f32 to vector<16x16xf32>
    %104 = arith.mulf %103, %102 : vector<16x16xf32>
    %105 = arith.addf %91, %104 : vector<16x16xf32>
    %cst_65 = arith.constant 0.333333343 : f32
    %106 = vector.broadcast %cst_65 : f32 to vector<16x16xf32>
    %107 = arith.mulf %106, %102 : vector<16x16xf32>
    %108 = arith.addf %94, %107 : vector<16x16xf32>
    %cst_66 = arith.constant 0.333333343 : f32
    %109 = vector.broadcast %cst_66 : f32 to vector<16x16xf32>
    %110 = arith.mulf %109, %102 : vector<16x16xf32>
    %111 = arith.addf %97, %110 : vector<16x16xf32>
    %cst_67 = arith.constant 0.333333343 : f32
    %112 = vector.broadcast %cst_67 : f32 to vector<16x16xf32>
    %113 = arith.mulf %112, %102 : vector<16x16xf32>
    %114 = arith.addf %100, %113 : vector<16x16xf32>
    %c0_68 = arith.constant 0 : index
    %c1_69 = arith.constant 1 : index
    %c2_70 = arith.constant 2 : index
    %115 = vector.load %arg4[%c0_68, %c1_69, %c2_70] : memref<3x18x18xf32, #tpu.memory_space<vmem>>, vector<1x16x16xf32>
    %116 = vector.shape_cast %115 : vector<1x16x16xf32> to vector<16x16xf32>
    %cst_71 = arith.constant 2.500000e-01 : f32
    %117 = vector.broadcast %cst_71 : f32 to vector<16x16xf32>
    %118 = arith.mulf %117, %116 : vector<16x16xf32>
    %119 = arith.addf %88, %118 : vector<16x16xf32>
    %cst_72 = arith.constant -0.202176884 : f32
    %120 = vector.broadcast %cst_72 : f32 to vector<16x16xf32>
    %121 = arith.mulf %120, %116 : vector<16x16xf32>
    %122 = arith.addf %105, %121 : vector<16x16xf32>
    %cst_73 = arith.constant -0.147713169 : f32
    %123 = vector.broadcast %cst_73 : f32 to vector<16x16xf32>
    %124 = arith.mulf %123, %116 : vector<16x16xf32>
    %125 = arith.addf %108, %124 : vector<16x16xf32>
    %cst_74 = arith.constant 0.294165641 : f32
    %126 = vector.broadcast %cst_74 : f32 to vector<16x16xf32>
    %127 = arith.mulf %126, %116 : vector<16x16xf32>
    %128 = arith.addf %111, %127 : vector<16x16xf32>
    %cst_75 = arith.constant -0.147713169 : f32
    %129 = vector.broadcast %cst_75 : f32 to vector<16x16xf32>
    %130 = arith.mulf %129, %116 : vector<16x16xf32>
    %131 = arith.addf %114, %130 : vector<16x16xf32>
    %c0_76 = arith.constant 0 : index
    %c2_77 = arith.constant 2 : index
    %c0_78 = arith.constant 0 : index
    %132 = vector.load %arg4[%c0_76, %c2_77, %c0_78] : memref<3x18x18xf32, #tpu.memory_space<vmem>>, vector<1x16x16xf32>
    %133 = vector.shape_cast %132 : vector<1x16x16xf32> to vector<16x16xf32>
    %cst_79 = arith.constant -1.250000e-01 : f32
    %134 = vector.broadcast %cst_79 : f32 to vector<16x16xf32>
    %135 = arith.mulf %134, %133 : vector<16x16xf32>
    %136 = arith.addf %119, %135 : vector<16x16xf32>
    %cst_80 = arith.constant 1.250000e-01 : f32
    %137 = vector.broadcast %cst_80 : f32 to vector<16x16xf32>
    %138 = arith.mulf %137, %133 : vector<16x16xf32>
    %139 = arith.addf %71, %138 : vector<16x16xf32>
    %cst_81 = arith.constant -0.178420469 : f32
    %140 = vector.broadcast %cst_81 : f32 to vector<16x16xf32>
    %141 = arith.mulf %140, %133 : vector<16x16xf32>
    %142 = arith.addf %122, %141 : vector<16x16xf32>
    %cst_82 = arith.constant 0.259600252 : f32
    %143 = vector.broadcast %cst_82 : f32 to vector<16x16xf32>
    %144 = arith.mulf %143, %133 : vector<16x16xf32>
    %145 = arith.addf %125, %144 : vector<16x16xf32>
    %cst_83 = arith.constant -0.178420469 : f32
    %146 = vector.broadcast %cst_83 : f32 to vector<16x16xf32>
    %147 = arith.mulf %146, %133 : vector<16x16xf32>
    %148 = arith.addf %128, %147 : vector<16x16xf32>
    %cst_84 = arith.constant -0.0326499566 : f32
    %149 = vector.broadcast %cst_84 : f32 to vector<16x16xf32>
    %150 = arith.mulf %149, %133 : vector<16x16xf32>
    %151 = arith.addf %131, %150 : vector<16x16xf32>
    %c0_85 = arith.constant 0 : index
    %c2_86 = arith.constant 2 : index
    %c1_87 = arith.constant 1 : index
    %152 = vector.load %arg4[%c0_85, %c2_86, %c1_87] : memref<3x18x18xf32, #tpu.memory_space<vmem>>, vector<1x16x16xf32>
    %153 = vector.shape_cast %152 : vector<1x16x16xf32> to vector<16x16xf32>
    %cst_88 = arith.constant 2.500000e-01 : f32
    %154 = vector.broadcast %cst_88 : f32 to vector<16x16xf32>
    %155 = arith.mulf %154, %153 : vector<16x16xf32>
    %156 = arith.addf %139, %155 : vector<16x16xf32>
    %cst_89 = arith.constant 0.294165641 : f32
    %157 = vector.broadcast %cst_89 : f32 to vector<16x16xf32>
    %158 = arith.mulf %157, %153 : vector<16x16xf32>
    %159 = arith.addf %142, %158 : vector<16x16xf32>
    %cst_90 = arith.constant -0.147713169 : f32
    %160 = vector.broadcast %cst_90 : f32 to vector<16x16xf32>
    %161 = arith.mulf %160, %153 : vector<16x16xf32>
    %162 = arith.addf %145, %161 : vector<16x16xf32>
    %cst_91 = arith.constant -0.202176884 : f32
    %163 = vector.broadcast %cst_91 : f32 to vector<16x16xf32>
    %164 = arith.mulf %163, %153 : vector<16x16xf32>
    %165 = arith.addf %148, %164 : vector<16x16xf32>
    %cst_92 = arith.constant -0.147713169 : f32
    %166 = vector.broadcast %cst_92 : f32 to vector<16x16xf32>
    %167 = arith.mulf %166, %153 : vector<16x16xf32>
    %168 = arith.addf %151, %167 : vector<16x16xf32>
    %c0_93 = arith.constant 0 : index
    %c2_94 = arith.constant 2 : index
    %c2_95 = arith.constant 2 : index
    %169 = vector.load %arg4[%c0_93, %c2_94, %c2_95] : memref<3x18x18xf32, #tpu.memory_space<vmem>>, vector<1x16x16xf32>
    %170 = vector.shape_cast %169 : vector<1x16x16xf32> to vector<16x16xf32>
    %cst_96 = arith.constant 1.250000e-01 : f32
    %171 = vector.broadcast %cst_96 : f32 to vector<16x16xf32>
    %172 = arith.mulf %171, %170 : vector<16x16xf32>
    %173 = arith.addf %136, %172 : vector<16x16xf32>
    %cst_97 = arith.constant 1.250000e-01 : f32
    %174 = vector.broadcast %cst_97 : f32 to vector<16x16xf32>
    %175 = arith.mulf %174, %170 : vector<16x16xf32>
    %176 = arith.addf %156, %175 : vector<16x16xf32>
    %cst_98 = arith.constant -0.178420469 : f32
    %177 = vector.broadcast %cst_98 : f32 to vector<16x16xf32>
    %178 = arith.mulf %177, %170 : vector<16x16xf32>
    %179 = arith.addf %159, %178 : vector<16x16xf32>
    %cst_99 = arith.constant -0.0326499566 : f32
    %180 = vector.broadcast %cst_99 : f32 to vector<16x16xf32>
    %181 = arith.mulf %180, %170 : vector<16x16xf32>
    %182 = arith.addf %162, %181 : vector<16x16xf32>
    %cst_100 = arith.constant -0.178420469 : f32
    %183 = vector.broadcast %cst_100 : f32 to vector<16x16xf32>
    %184 = arith.mulf %183, %170 : vector<16x16xf32>
    %185 = arith.addf %165, %184 : vector<16x16xf32>
    %cst_101 = arith.constant 0.259600252 : f32
    %186 = vector.broadcast %cst_101 : f32 to vector<16x16xf32>
    %187 = arith.mulf %186, %170 : vector<16x16xf32>
    %188 = arith.addf %168, %187 : vector<16x16xf32>
    %189 = arith.mulf %173, %173 : vector<16x16xf32>
    %190 = arith.mulf %176, %176 : vector<16x16xf32>
    %191 = arith.addf %189, %190 : vector<16x16xf32>
    %cst_102 = arith.constant 9.99999996E-13 : f32
    %192 = vector.broadcast %cst_102 : f32 to vector<16x16xf32>
    %193 = arith.addf %191, %192 : vector<16x16xf32>
    %194 = math.sqrt %193 : vector<16x16xf32>
    %195 = arith.addf %24, %194 : vector<16x16xf32>
    %cst_103 = arith.constant 0.000000e+00 : f32
    %196 = vector.broadcast %cst_103 : f32 to vector<16x16xf32>
    %cst_104 = arith.constant 0.000000e+00 : f32
    %197 = vector.broadcast %cst_104 : f32 to vector<16x16xf32>
    %c1_105 = arith.constant 1 : index
    %c0_106 = arith.constant 0 : index
    %c0_107 = arith.constant 0 : index
    %198 = vector.load %arg4[%c1_105, %c0_106, %c0_107] : memref<3x18x18xf32, #tpu.memory_space<vmem>>, vector<1x16x16xf32>
    %199 = vector.shape_cast %198 : vector<1x16x16xf32> to vector<16x16xf32>
    %cst_108 = arith.constant -1.250000e-01 : f32
    %200 = vector.broadcast %cst_108 : f32 to vector<16x16xf32>
    %201 = arith.mulf %200, %199 : vector<16x16xf32>
    %202 = arith.addf %196, %201 : vector<16x16xf32>
    %cst_109 = arith.constant -1.250000e-01 : f32
    %203 = vector.broadcast %cst_109 : f32 to vector<16x16xf32>
    %204 = arith.mulf %203, %199 : vector<16x16xf32>
    %205 = arith.addf %197, %204 : vector<16x16xf32>
    %cst_110 = arith.constant -0.178420469 : f32
    %206 = vector.broadcast %cst_110 : f32 to vector<16x16xf32>
    %207 = arith.mulf %206, %199 : vector<16x16xf32>
    %208 = arith.addf %179, %207 : vector<16x16xf32>
    %cst_111 = arith.constant -0.0326499566 : f32
    %209 = vector.broadcast %cst_111 : f32 to vector<16x16xf32>
    %210 = arith.mulf %209, %199 : vector<16x16xf32>
    %211 = arith.addf %182, %210 : vector<16x16xf32>
    %cst_112 = arith.constant -0.178420469 : f32
    %212 = vector.broadcast %cst_112 : f32 to vector<16x16xf32>
    %213 = arith.mulf %212, %199 : vector<16x16xf32>
    %214 = arith.addf %185, %213 : vector<16x16xf32>
    %cst_113 = arith.constant 0.259600252 : f32
    %215 = vector.broadcast %cst_113 : f32 to vector<16x16xf32>
    %216 = arith.mulf %215, %199 : vector<16x16xf32>
    %217 = arith.addf %188, %216 : vector<16x16xf32>
    %c1_114 = arith.constant 1 : index
    %c0_115 = arith.constant 0 : index
    %c1_116 = arith.constant 1 : index
    %218 = vector.load %arg4[%c1_114, %c0_115, %c1_116] : memref<3x18x18xf32, #tpu.memory_space<vmem>>, vector<1x16x16xf32>
    %219 = vector.shape_cast %218 : vector<1x16x16xf32> to vector<16x16xf32>
    %cst_117 = arith.constant -2.500000e-01 : f32
    %220 = vector.broadcast %cst_117 : f32 to vector<16x16xf32>
    %221 = arith.mulf %220, %219 : vector<16x16xf32>
    %222 = arith.addf %205, %221 : vector<16x16xf32>
    %cst_118 = arith.constant 0.294165641 : f32
    %223 = vector.broadcast %cst_118 : f32 to vector<16x16xf32>
    %224 = arith.mulf %223, %219 : vector<16x16xf32>
    %225 = arith.addf %208, %224 : vector<16x16xf32>
    %cst_119 = arith.constant -0.147713169 : f32
    %226 = vector.broadcast %cst_119 : f32 to vector<16x16xf32>
    %227 = arith.mulf %226, %219 : vector<16x16xf32>
    %228 = arith.addf %211, %227 : vector<16x16xf32>
    %cst_120 = arith.constant -0.202176884 : f32
    %229 = vector.broadcast %cst_120 : f32 to vector<16x16xf32>
    %230 = arith.mulf %229, %219 : vector<16x16xf32>
    %231 = arith.addf %214, %230 : vector<16x16xf32>
    %cst_121 = arith.constant -0.147713169 : f32
    %232 = vector.broadcast %cst_121 : f32 to vector<16x16xf32>
    %233 = arith.mulf %232, %219 : vector<16x16xf32>
    %234 = arith.addf %217, %233 : vector<16x16xf32>
    %c1_122 = arith.constant 1 : index
    %c0_123 = arith.constant 0 : index
    %c2_124 = arith.constant 2 : index
    %235 = vector.load %arg4[%c1_122, %c0_123, %c2_124] : memref<3x18x18xf32, #tpu.memory_space<vmem>>, vector<1x16x16xf32>
    %236 = vector.shape_cast %235 : vector<1x16x16xf32> to vector<16x16xf32>
    %cst_125 = arith.constant 1.250000e-01 : f32
    %237 = vector.broadcast %cst_125 : f32 to vector<16x16xf32>
    %238 = arith.mulf %237, %236 : vector<16x16xf32>
    %239 = arith.addf %202, %238 : vector<16x16xf32>
    %cst_126 = arith.constant -1.250000e-01 : f32
    %240 = vector.broadcast %cst_126 : f32 to vector<16x16xf32>
    %241 = arith.mulf %240, %236 : vector<16x16xf32>
    %242 = arith.addf %222, %241 : vector<16x16xf32>
    %cst_127 = arith.constant -0.178420469 : f32
    %243 = vector.broadcast %cst_127 : f32 to vector<16x16xf32>
    %244 = arith.mulf %243, %236 : vector<16x16xf32>
    %245 = arith.addf %225, %244 : vector<16x16xf32>
    %cst_128 = arith.constant 0.259600252 : f32
    %246 = vector.broadcast %cst_128 : f32 to vector<16x16xf32>
    %247 = arith.mulf %246, %236 : vector<16x16xf32>
    %248 = arith.addf %228, %247 : vector<16x16xf32>
    %cst_129 = arith.constant -0.178420469 : f32
    %249 = vector.broadcast %cst_129 : f32 to vector<16x16xf32>
    %250 = arith.mulf %249, %236 : vector<16x16xf32>
    %251 = arith.addf %231, %250 : vector<16x16xf32>
    %cst_130 = arith.constant -0.0326499566 : f32
    %252 = vector.broadcast %cst_130 : f32 to vector<16x16xf32>
    %253 = arith.mulf %252, %236 : vector<16x16xf32>
    %254 = arith.addf %234, %253 : vector<16x16xf32>
    %c1_131 = arith.constant 1 : index
    %c1_132 = arith.constant 1 : index
    %c0_133 = arith.constant 0 : index
    %255 = vector.load %arg4[%c1_131, %c1_132, %c0_133] : memref<3x18x18xf32, #tpu.memory_space<vmem>>, vector<1x16x16xf32>
    %256 = vector.shape_cast %255 : vector<1x16x16xf32> to vector<16x16xf32>
    %cst_134 = arith.constant -2.500000e-01 : f32
    %257 = vector.broadcast %cst_134 : f32 to vector<16x16xf32>
    %258 = arith.mulf %257, %256 : vector<16x16xf32>
    %259 = arith.addf %239, %258 : vector<16x16xf32>
    %cst_135 = arith.constant -0.202176884 : f32
    %260 = vector.broadcast %cst_135 : f32 to vector<16x16xf32>
    %261 = arith.mulf %260, %256 : vector<16x16xf32>
    %262 = arith.addf %245, %261 : vector<16x16xf32>
    %cst_136 = arith.constant -0.147713169 : f32
    %263 = vector.broadcast %cst_136 : f32 to vector<16x16xf32>
    %264 = arith.mulf %263, %256 : vector<16x16xf32>
    %265 = arith.addf %248, %264 : vector<16x16xf32>
    %cst_137 = arith.constant 0.294165641 : f32
    %266 = vector.broadcast %cst_137 : f32 to vector<16x16xf32>
    %267 = arith.mulf %266, %256 : vector<16x16xf32>
    %268 = arith.addf %251, %267 : vector<16x16xf32>
    %cst_138 = arith.constant -0.147713169 : f32
    %269 = vector.broadcast %cst_138 : f32 to vector<16x16xf32>
    %270 = arith.mulf %269, %256 : vector<16x16xf32>
    %271 = arith.addf %254, %270 : vector<16x16xf32>
    %c1_139 = arith.constant 1 : index
    %c1_140 = arith.constant 1 : index
    %c1_141 = arith.constant 1 : index
    %272 = vector.load %arg4[%c1_139, %c1_140, %c1_141] : memref<3x18x18xf32, #tpu.memory_space<vmem>>, vector<1x16x16xf32>
    %273 = vector.shape_cast %272 : vector<1x16x16xf32> to vector<16x16xf32>
    %cst_142 = arith.constant 0.333333343 : f32
    %274 = vector.broadcast %cst_142 : f32 to vector<16x16xf32>
    %275 = arith.mulf %274, %273 : vector<16x16xf32>
    %276 = arith.addf %262, %275 : vector<16x16xf32>
    %cst_143 = arith.constant 0.333333343 : f32
    %277 = vector.broadcast %cst_143 : f32 to vector<16x16xf32>
    %278 = arith.mulf %277, %273 : vector<16x16xf32>
    %279 = arith.addf %265, %278 : vector<16x16xf32>
    %cst_144 = arith.constant 0.333333343 : f32
    %280 = vector.broadcast %cst_144 : f32 to vector<16x16xf32>
    %281 = arith.mulf %280, %273 : vector<16x16xf32>
    %282 = arith.addf %268, %281 : vector<16x16xf32>
    %cst_145 = arith.constant 0.333333343 : f32
    %283 = vector.broadcast %cst_145 : f32 to vector<16x16xf32>
    %284 = arith.mulf %283, %273 : vector<16x16xf32>
    %285 = arith.addf %271, %284 : vector<16x16xf32>
    %c1_146 = arith.constant 1 : index
    %c1_147 = arith.constant 1 : index
    %c2_148 = arith.constant 2 : index
    %286 = vector.load %arg4[%c1_146, %c1_147, %c2_148] : memref<3x18x18xf32, #tpu.memory_space<vmem>>, vector<1x16x16xf32>
    %287 = vector.shape_cast %286 : vector<1x16x16xf32> to vector<16x16xf32>
    %cst_149 = arith.constant 2.500000e-01 : f32
    %288 = vector.broadcast %cst_149 : f32 to vector<16x16xf32>
    %289 = arith.mulf %288, %287 : vector<16x16xf32>
    %290 = arith.addf %259, %289 : vector<16x16xf32>
    %cst_150 = arith.constant -0.202176884 : f32
    %291 = vector.broadcast %cst_150 : f32 to vector<16x16xf32>
    %292 = arith.mulf %291, %287 : vector<16x16xf32>
    %293 = arith.addf %276, %292 : vector<16x16xf32>
    %cst_151 = arith.constant -0.147713169 : f32
    %294 = vector.broadcast %cst_151 : f32 to vector<16x16xf32>
    %295 = arith.mulf %294, %287 : vector<16x16xf32>
    %296 = arith.addf %279, %295 : vector<16x16xf32>
    %cst_152 = arith.constant 0.294165641 : f32
    %297 = vector.broadcast %cst_152 : f32 to vector<16x16xf32>
    %298 = arith.mulf %297, %287 : vector<16x16xf32>
    %299 = arith.addf %282, %298 : vector<16x16xf32>
    %cst_153 = arith.constant -0.147713169 : f32
    %300 = vector.broadcast %cst_153 : f32 to vector<16x16xf32>
    %301 = arith.mulf %300, %287 : vector<16x16xf32>
    %302 = arith.addf %285, %301 : vector<16x16xf32>
    %c1_154 = arith.constant 1 : index
    %c2_155 = arith.constant 2 : index
    %c0_156 = arith.constant 0 : index
    %303 = vector.load %arg4[%c1_154, %c2_155, %c0_156] : memref<3x18x18xf32, #tpu.memory_space<vmem>>, vector<1x16x16xf32>
    %304 = vector.shape_cast %303 : vector<1x16x16xf32> to vector<16x16xf32>
    %cst_157 = arith.constant -1.250000e-01 : f32
    %305 = vector.broadcast %cst_157 : f32 to vector<16x16xf32>
    %306 = arith.mulf %305, %304 : vector<16x16xf32>
    %307 = arith.addf %290, %306 : vector<16x16xf32>
    %cst_158 = arith.constant 1.250000e-01 : f32
    %308 = vector.broadcast %cst_158 : f32 to vector<16x16xf32>
    %309 = arith.mulf %308, %304 : vector<16x16xf32>
    %310 = arith.addf %242, %309 : vector<16x16xf32>
    %cst_159 = arith.constant -0.178420469 : f32
    %311 = vector.broadcast %cst_159 : f32 to vector<16x16xf32>
    %312 = arith.mulf %311, %304 : vector<16x16xf32>
    %313 = arith.addf %293, %312 : vector<16x16xf32>
    %cst_160 = arith.constant 0.259600252 : f32
    %314 = vector.broadcast %cst_160 : f32 to vector<16x16xf32>
    %315 = arith.mulf %314, %304 : vector<16x16xf32>
    %316 = arith.addf %296, %315 : vector<16x16xf32>
    %cst_161 = arith.constant -0.178420469 : f32
    %317 = vector.broadcast %cst_161 : f32 to vector<16x16xf32>
    %318 = arith.mulf %317, %304 : vector<16x16xf32>
    %319 = arith.addf %299, %318 : vector<16x16xf32>
    %cst_162 = arith.constant -0.0326499566 : f32
    %320 = vector.broadcast %cst_162 : f32 to vector<16x16xf32>
    %321 = arith.mulf %320, %304 : vector<16x16xf32>
    %322 = arith.addf %302, %321 : vector<16x16xf32>
    %c1_163 = arith.constant 1 : index
    %c2_164 = arith.constant 2 : index
    %c1_165 = arith.constant 1 : index
    %323 = vector.load %arg4[%c1_163, %c2_164, %c1_165] : memref<3x18x18xf32, #tpu.memory_space<vmem>>, vector<1x16x16xf32>
    %324 = vector.shape_cast %323 : vector<1x16x16xf32> to vector<16x16xf32>
    %cst_166 = arith.constant 2.500000e-01 : f32
    %325 = vector.broadcast %cst_166 : f32 to vector<16x16xf32>
    %326 = arith.mulf %325, %324 : vector<16x16xf32>
    %327 = arith.addf %310, %326 : vector<16x16xf32>
    %cst_167 = arith.constant 0.294165641 : f32
    %328 = vector.broadcast %cst_167 : f32 to vector<16x16xf32>
    %329 = arith.mulf %328, %324 : vector<16x16xf32>
    %330 = arith.addf %313, %329 : vector<16x16xf32>
    %cst_168 = arith.constant -0.147713169 : f32
    %331 = vector.broadcast %cst_168 : f32 to vector<16x16xf32>
    %332 = arith.mulf %331, %324 : vector<16x16xf32>
    %333 = arith.addf %316, %332 : vector<16x16xf32>
    %cst_169 = arith.constant -0.202176884 : f32
    %334 = vector.broadcast %cst_169 : f32 to vector<16x16xf32>
    %335 = arith.mulf %334, %324 : vector<16x16xf32>
    %336 = arith.addf %319, %335 : vector<16x16xf32>
    %cst_170 = arith.constant -0.147713169 : f32
    %337 = vector.broadcast %cst_170 : f32 to vector<16x16xf32>
    %338 = arith.mulf %337, %324 : vector<16x16xf32>
    %339 = arith.addf %322, %338 : vector<16x16xf32>
    %c1_171 = arith.constant 1 : index
    %c2_172 = arith.constant 2 : index
    %c2_173 = arith.constant 2 : index
    %340 = vector.load %arg4[%c1_171, %c2_172, %c2_173] : memref<3x18x18xf32, #tpu.memory_space<vmem>>, vector<1x16x16xf32>
    %341 = vector.shape_cast %340 : vector<1x16x16xf32> to vector<16x16xf32>
    %cst_174 = arith.constant 1.250000e-01 : f32
    %342 = vector.broadcast %cst_174 : f32 to vector<16x16xf32>
    %343 = arith.mulf %342, %341 : vector<16x16xf32>
    %344 = arith.addf %307, %343 : vector<16x16xf32>
    %cst_175 = arith.constant 1.250000e-01 : f32
    %345 = vector.broadcast %cst_175 : f32 to vector<16x16xf32>
    %346 = arith.mulf %345, %341 : vector<16x16xf32>
    %347 = arith.addf %327, %346 : vector<16x16xf32>
    %cst_176 = arith.constant -0.178420469 : f32
    %348 = vector.broadcast %cst_176 : f32 to vector<16x16xf32>
    %349 = arith.mulf %348, %341 : vector<16x16xf32>
    %350 = arith.addf %330, %349 : vector<16x16xf32>
    %cst_177 = arith.constant -0.0326499566 : f32
    %351 = vector.broadcast %cst_177 : f32 to vector<16x16xf32>
    %352 = arith.mulf %351, %341 : vector<16x16xf32>
    %353 = arith.addf %333, %352 : vector<16x16xf32>
    %cst_178 = arith.constant -0.178420469 : f32
    %354 = vector.broadcast %cst_178 : f32 to vector<16x16xf32>
    %355 = arith.mulf %354, %341 : vector<16x16xf32>
    %356 = arith.addf %336, %355 : vector<16x16xf32>
    %cst_179 = arith.constant 0.259600252 : f32
    %357 = vector.broadcast %cst_179 : f32 to vector<16x16xf32>
    %358 = arith.mulf %357, %341 : vector<16x16xf32>
    %359 = arith.addf %339, %358 : vector<16x16xf32>
    %360 = arith.mulf %344, %344 : vector<16x16xf32>
    %361 = arith.mulf %347, %347 : vector<16x16xf32>
    %362 = arith.addf %360, %361 : vector<16x16xf32>
    %cst_180 = arith.constant 9.99999996E-13 : f32
    %363 = vector.broadcast %cst_180 : f32 to vector<16x16xf32>
    %364 = arith.addf %362, %363 : vector<16x16xf32>
    %365 = math.sqrt %364 : vector<16x16xf32>
    %366 = arith.addf %195, %365 : vector<16x16xf32>
    %cst_181 = arith.constant 0.000000e+00 : f32
    %367 = vector.broadcast %cst_181 : f32 to vector<16x16xf32>
    %cst_182 = arith.constant 0.000000e+00 : f32
    %368 = vector.broadcast %cst_182 : f32 to vector<16x16xf32>
    %c2_183 = arith.constant 2 : index
    %c0_184 = arith.constant 0 : index
    %c0_185 = arith.constant 0 : index
    %369 = vector.load %arg4[%c2_183, %c0_184, %c0_185] : memref<3x18x18xf32, #tpu.memory_space<vmem>>, vector<1x16x16xf32>
    %370 = vector.shape_cast %369 : vector<1x16x16xf32> to vector<16x16xf32>
    %cst_186 = arith.constant -1.250000e-01 : f32
    %371 = vector.broadcast %cst_186 : f32 to vector<16x16xf32>
    %372 = arith.mulf %371, %370 : vector<16x16xf32>
    %373 = arith.addf %367, %372 : vector<16x16xf32>
    %cst_187 = arith.constant -1.250000e-01 : f32
    %374 = vector.broadcast %cst_187 : f32 to vector<16x16xf32>
    %375 = arith.mulf %374, %370 : vector<16x16xf32>
    %376 = arith.addf %368, %375 : vector<16x16xf32>
    %cst_188 = arith.constant -0.178420469 : f32
    %377 = vector.broadcast %cst_188 : f32 to vector<16x16xf32>
    %378 = arith.mulf %377, %370 : vector<16x16xf32>
    %379 = arith.addf %350, %378 : vector<16x16xf32>
    %cst_189 = arith.constant -0.0326499566 : f32
    %380 = vector.broadcast %cst_189 : f32 to vector<16x16xf32>
    %381 = arith.mulf %380, %370 : vector<16x16xf32>
    %382 = arith.addf %353, %381 : vector<16x16xf32>
    %cst_190 = arith.constant -0.178420469 : f32
    %383 = vector.broadcast %cst_190 : f32 to vector<16x16xf32>
    %384 = arith.mulf %383, %370 : vector<16x16xf32>
    %385 = arith.addf %356, %384 : vector<16x16xf32>
    %cst_191 = arith.constant 0.259600252 : f32
    %386 = vector.broadcast %cst_191 : f32 to vector<16x16xf32>
    %387 = arith.mulf %386, %370 : vector<16x16xf32>
    %388 = arith.addf %359, %387 : vector<16x16xf32>
    %c2_192 = arith.constant 2 : index
    %c0_193 = arith.constant 0 : index
    %c1_194 = arith.constant 1 : index
    %389 = vector.load %arg4[%c2_192, %c0_193, %c1_194] : memref<3x18x18xf32, #tpu.memory_space<vmem>>, vector<1x16x16xf32>
    %390 = vector.shape_cast %389 : vector<1x16x16xf32> to vector<16x16xf32>
    %cst_195 = arith.constant -2.500000e-01 : f32
    %391 = vector.broadcast %cst_195 : f32 to vector<16x16xf32>
    %392 = arith.mulf %391, %390 : vector<16x16xf32>
    %393 = arith.addf %376, %392 : vector<16x16xf32>
    %cst_196 = arith.constant 0.294165641 : f32
    %394 = vector.broadcast %cst_196 : f32 to vector<16x16xf32>
    %395 = arith.mulf %394, %390 : vector<16x16xf32>
    %396 = arith.addf %379, %395 : vector<16x16xf32>
    %cst_197 = arith.constant -0.147713169 : f32
    %397 = vector.broadcast %cst_197 : f32 to vector<16x16xf32>
    %398 = arith.mulf %397, %390 : vector<16x16xf32>
    %399 = arith.addf %382, %398 : vector<16x16xf32>
    %cst_198 = arith.constant -0.202176884 : f32
    %400 = vector.broadcast %cst_198 : f32 to vector<16x16xf32>
    %401 = arith.mulf %400, %390 : vector<16x16xf32>
    %402 = arith.addf %385, %401 : vector<16x16xf32>
    %cst_199 = arith.constant -0.147713169 : f32
    %403 = vector.broadcast %cst_199 : f32 to vector<16x16xf32>
    %404 = arith.mulf %403, %390 : vector<16x16xf32>
    %405 = arith.addf %388, %404 : vector<16x16xf32>
    %c2_200 = arith.constant 2 : index
    %c0_201 = arith.constant 0 : index
    %c2_202 = arith.constant 2 : index
    %406 = vector.load %arg4[%c2_200, %c0_201, %c2_202] : memref<3x18x18xf32, #tpu.memory_space<vmem>>, vector<1x16x16xf32>
    %407 = vector.shape_cast %406 : vector<1x16x16xf32> to vector<16x16xf32>
    %cst_203 = arith.constant 1.250000e-01 : f32
    %408 = vector.broadcast %cst_203 : f32 to vector<16x16xf32>
    %409 = arith.mulf %408, %407 : vector<16x16xf32>
    %410 = arith.addf %373, %409 : vector<16x16xf32>
    %cst_204 = arith.constant -1.250000e-01 : f32
    %411 = vector.broadcast %cst_204 : f32 to vector<16x16xf32>
    %412 = arith.mulf %411, %407 : vector<16x16xf32>
    %413 = arith.addf %393, %412 : vector<16x16xf32>
    %cst_205 = arith.constant -0.178420469 : f32
    %414 = vector.broadcast %cst_205 : f32 to vector<16x16xf32>
    %415 = arith.mulf %414, %407 : vector<16x16xf32>
    %416 = arith.addf %396, %415 : vector<16x16xf32>
    %cst_206 = arith.constant 0.259600252 : f32
    %417 = vector.broadcast %cst_206 : f32 to vector<16x16xf32>
    %418 = arith.mulf %417, %407 : vector<16x16xf32>
    %419 = arith.addf %399, %418 : vector<16x16xf32>
    %cst_207 = arith.constant -0.178420469 : f32
    %420 = vector.broadcast %cst_207 : f32 to vector<16x16xf32>
    %421 = arith.mulf %420, %407 : vector<16x16xf32>
    %422 = arith.addf %402, %421 : vector<16x16xf32>
    %cst_208 = arith.constant -0.0326499566 : f32
    %423 = vector.broadcast %cst_208 : f32 to vector<16x16xf32>
    %424 = arith.mulf %423, %407 : vector<16x16xf32>
    %425 = arith.addf %405, %424 : vector<16x16xf32>
    %c2_209 = arith.constant 2 : index
    %c1_210 = arith.constant 1 : index
    %c0_211 = arith.constant 0 : index
    %426 = vector.load %arg4[%c2_209, %c1_210, %c0_211] : memref<3x18x18xf32, #tpu.memory_space<vmem>>, vector<1x16x16xf32>
    %427 = vector.shape_cast %426 : vector<1x16x16xf32> to vector<16x16xf32>
    %cst_212 = arith.constant -2.500000e-01 : f32
    %428 = vector.broadcast %cst_212 : f32 to vector<16x16xf32>
    %429 = arith.mulf %428, %427 : vector<16x16xf32>
    %430 = arith.addf %410, %429 : vector<16x16xf32>
    %cst_213 = arith.constant -0.202176884 : f32
    %431 = vector.broadcast %cst_213 : f32 to vector<16x16xf32>
    %432 = arith.mulf %431, %427 : vector<16x16xf32>
    %433 = arith.addf %416, %432 : vector<16x16xf32>
    %cst_214 = arith.constant -0.147713169 : f32
    %434 = vector.broadcast %cst_214 : f32 to vector<16x16xf32>
    %435 = arith.mulf %434, %427 : vector<16x16xf32>
    %436 = arith.addf %419, %435 : vector<16x16xf32>
    %cst_215 = arith.constant 0.294165641 : f32
    %437 = vector.broadcast %cst_215 : f32 to vector<16x16xf32>
    %438 = arith.mulf %437, %427 : vector<16x16xf32>
    %439 = arith.addf %422, %438 : vector<16x16xf32>
    %cst_216 = arith.constant -0.147713169 : f32
    %440 = vector.broadcast %cst_216 : f32 to vector<16x16xf32>
    %441 = arith.mulf %440, %427 : vector<16x16xf32>
    %442 = arith.addf %425, %441 : vector<16x16xf32>
    %c2_217 = arith.constant 2 : index
    %c1_218 = arith.constant 1 : index
    %c1_219 = arith.constant 1 : index
    %443 = vector.load %arg4[%c2_217, %c1_218, %c1_219] : memref<3x18x18xf32, #tpu.memory_space<vmem>>, vector<1x16x16xf32>
    %444 = vector.shape_cast %443 : vector<1x16x16xf32> to vector<16x16xf32>
    %cst_220 = arith.constant 0.333333343 : f32
    %445 = vector.broadcast %cst_220 : f32 to vector<16x16xf32>
    %446 = arith.mulf %445, %444 : vector<16x16xf32>
    %447 = arith.addf %433, %446 : vector<16x16xf32>
    %cst_221 = arith.constant 0.333333343 : f32
    %448 = vector.broadcast %cst_221 : f32 to vector<16x16xf32>
    %449 = arith.mulf %448, %444 : vector<16x16xf32>
    %450 = arith.addf %436, %449 : vector<16x16xf32>
    %cst_222 = arith.constant 0.333333343 : f32
    %451 = vector.broadcast %cst_222 : f32 to vector<16x16xf32>
    %452 = arith.mulf %451, %444 : vector<16x16xf32>
    %453 = arith.addf %439, %452 : vector<16x16xf32>
    %cst_223 = arith.constant 0.333333343 : f32
    %454 = vector.broadcast %cst_223 : f32 to vector<16x16xf32>
    %455 = arith.mulf %454, %444 : vector<16x16xf32>
    %456 = arith.addf %442, %455 : vector<16x16xf32>
    %c2_224 = arith.constant 2 : index
    %c1_225 = arith.constant 1 : index
    %c2_226 = arith.constant 2 : index
    %457 = vector.load %arg4[%c2_224, %c1_225, %c2_226] : memref<3x18x18xf32, #tpu.memory_space<vmem>>, vector<1x16x16xf32>
    %458 = vector.shape_cast %457 : vector<1x16x16xf32> to vector<16x16xf32>
    %cst_227 = arith.constant 2.500000e-01 : f32
    %459 = vector.broadcast %cst_227 : f32 to vector<16x16xf32>
    %460 = arith.mulf %459, %458 : vector<16x16xf32>
    %461 = arith.addf %430, %460 : vector<16x16xf32>
    %cst_228 = arith.constant -0.202176884 : f32
    %462 = vector.broadcast %cst_228 : f32 to vector<16x16xf32>
    %463 = arith.mulf %462, %458 : vector<16x16xf32>
    %464 = arith.addf %447, %463 : vector<16x16xf32>
    %cst_229 = arith.constant -0.147713169 : f32
    %465 = vector.broadcast %cst_229 : f32 to vector<16x16xf32>
    %466 = arith.mulf %465, %458 : vector<16x16xf32>
    %467 = arith.addf %450, %466 : vector<16x16xf32>
    %cst_230 = arith.constant 0.294165641 : f32
    %468 = vector.broadcast %cst_230 : f32 to vector<16x16xf32>
    %469 = arith.mulf %468, %458 : vector<16x16xf32>
    %470 = arith.addf %453, %469 : vector<16x16xf32>
    %cst_231 = arith.constant -0.147713169 : f32
    %471 = vector.broadcast %cst_231 : f32 to vector<16x16xf32>
    %472 = arith.mulf %471, %458 : vector<16x16xf32>
    %473 = arith.addf %456, %472 : vector<16x16xf32>
    %c2_232 = arith.constant 2 : index
    %c2_233 = arith.constant 2 : index
    %c0_234 = arith.constant 0 : index
    %474 = vector.load %arg4[%c2_232, %c2_233, %c0_234] : memref<3x18x18xf32, #tpu.memory_space<vmem>>, vector<1x16x16xf32>
    %475 = vector.shape_cast %474 : vector<1x16x16xf32> to vector<16x16xf32>
    %cst_235 = arith.constant -1.250000e-01 : f32
    %476 = vector.broadcast %cst_235 : f32 to vector<16x16xf32>
    %477 = arith.mulf %476, %475 : vector<16x16xf32>
    %478 = arith.addf %461, %477 : vector<16x16xf32>
    %cst_236 = arith.constant 1.250000e-01 : f32
    %479 = vector.broadcast %cst_236 : f32 to vector<16x16xf32>
    %480 = arith.mulf %479, %475 : vector<16x16xf32>
    %481 = arith.addf %413, %480 : vector<16x16xf32>
    %cst_237 = arith.constant -0.178420469 : f32
    %482 = vector.broadcast %cst_237 : f32 to vector<16x16xf32>
    %483 = arith.mulf %482, %475 : vector<16x16xf32>
    %484 = arith.addf %464, %483 : vector<16x16xf32>
    %cst_238 = arith.constant 0.259600252 : f32
    %485 = vector.broadcast %cst_238 : f32 to vector<16x16xf32>
    %486 = arith.mulf %485, %475 : vector<16x16xf32>
    %487 = arith.addf %467, %486 : vector<16x16xf32>
    %cst_239 = arith.constant -0.178420469 : f32
    %488 = vector.broadcast %cst_239 : f32 to vector<16x16xf32>
    %489 = arith.mulf %488, %475 : vector<16x16xf32>
    %490 = arith.addf %470, %489 : vector<16x16xf32>
    %cst_240 = arith.constant -0.0326499566 : f32
    %491 = vector.broadcast %cst_240 : f32 to vector<16x16xf32>
    %492 = arith.mulf %491, %475 : vector<16x16xf32>
    %493 = arith.addf %473, %492 : vector<16x16xf32>
    %c2_241 = arith.constant 2 : index
    %c2_242 = arith.constant 2 : index
    %c1_243 = arith.constant 1 : index
    %494 = vector.load %arg4[%c2_241, %c2_242, %c1_243] : memref<3x18x18xf32, #tpu.memory_space<vmem>>, vector<1x16x16xf32>
    %495 = vector.shape_cast %494 : vector<1x16x16xf32> to vector<16x16xf32>
    %cst_244 = arith.constant 2.500000e-01 : f32
    %496 = vector.broadcast %cst_244 : f32 to vector<16x16xf32>
    %497 = arith.mulf %496, %495 : vector<16x16xf32>
    %498 = arith.addf %481, %497 : vector<16x16xf32>
    %cst_245 = arith.constant 0.294165641 : f32
    %499 = vector.broadcast %cst_245 : f32 to vector<16x16xf32>
    %500 = arith.mulf %499, %495 : vector<16x16xf32>
    %501 = arith.addf %484, %500 : vector<16x16xf32>
    %cst_246 = arith.constant -0.147713169 : f32
    %502 = vector.broadcast %cst_246 : f32 to vector<16x16xf32>
    %503 = arith.mulf %502, %495 : vector<16x16xf32>
    %504 = arith.addf %487, %503 : vector<16x16xf32>
    %cst_247 = arith.constant -0.202176884 : f32
    %505 = vector.broadcast %cst_247 : f32 to vector<16x16xf32>
    %506 = arith.mulf %505, %495 : vector<16x16xf32>
    %507 = arith.addf %490, %506 : vector<16x16xf32>
    %cst_248 = arith.constant -0.147713169 : f32
    %508 = vector.broadcast %cst_248 : f32 to vector<16x16xf32>
    %509 = arith.mulf %508, %495 : vector<16x16xf32>
    %510 = arith.addf %493, %509 : vector<16x16xf32>
    %c2_249 = arith.constant 2 : index
    %c2_250 = arith.constant 2 : index
    %c2_251 = arith.constant 2 : index
    %511 = vector.load %arg4[%c2_249, %c2_250, %c2_251] : memref<3x18x18xf32, #tpu.memory_space<vmem>>, vector<1x16x16xf32>
    %512 = vector.shape_cast %511 : vector<1x16x16xf32> to vector<16x16xf32>
    %cst_252 = arith.constant 1.250000e-01 : f32
    %513 = vector.broadcast %cst_252 : f32 to vector<16x16xf32>
    %514 = arith.mulf %513, %512 : vector<16x16xf32>
    %515 = arith.addf %478, %514 : vector<16x16xf32>
    %cst_253 = arith.constant 1.250000e-01 : f32
    %516 = vector.broadcast %cst_253 : f32 to vector<16x16xf32>
    %517 = arith.mulf %516, %512 : vector<16x16xf32>
    %518 = arith.addf %498, %517 : vector<16x16xf32>
    %cst_254 = arith.constant -0.178420469 : f32
    %519 = vector.broadcast %cst_254 : f32 to vector<16x16xf32>
    %520 = arith.mulf %519, %512 : vector<16x16xf32>
    %521 = arith.addf %501, %520 : vector<16x16xf32>
    %cst_255 = arith.constant -0.0326499566 : f32
    %522 = vector.broadcast %cst_255 : f32 to vector<16x16xf32>
    %523 = arith.mulf %522, %512 : vector<16x16xf32>
    %524 = arith.addf %504, %523 : vector<16x16xf32>
    %cst_256 = arith.constant -0.178420469 : f32
    %525 = vector.broadcast %cst_256 : f32 to vector<16x16xf32>
    %526 = arith.mulf %525, %512 : vector<16x16xf32>
    %527 = arith.addf %507, %526 : vector<16x16xf32>
    %cst_257 = arith.constant 0.259600252 : f32
    %528 = vector.broadcast %cst_257 : f32 to vector<16x16xf32>
    %529 = arith.mulf %528, %512 : vector<16x16xf32>
    %530 = arith.addf %510, %529 : vector<16x16xf32>
    %531 = arith.mulf %515, %515 : vector<16x16xf32>
    %532 = arith.mulf %518, %518 : vector<16x16xf32>
    %533 = arith.addf %531, %532 : vector<16x16xf32>
    %cst_258 = arith.constant 9.99999996E-13 : f32
    %534 = vector.broadcast %cst_258 : f32 to vector<16x16xf32>
    %535 = arith.addf %533, %534 : vector<16x16xf32>
    %536 = math.sqrt %535 : vector<16x16xf32>
    %537 = arith.addf %366, %536 : vector<16x16xf32>
    %538 = vector.broadcast %18 : f32 to vector<16x16xf32>
    %539 = arith.mulf %538, %521 : vector<16x16xf32>
    %c0_259 = arith.constant 0 : index
    %c0_260 = arith.constant 0 : index
    %c0_261 = arith.constant 0 : index
    %c0_262 = arith.constant 0 : index
    %540 = vector.load %arg3[%c0_259, %c0_260, %c0_261, %c0_262] : memref<1x5x16x16xf32, #tpu.memory_space<vmem>>, vector<1x1x16x16xf32>
    %541 = vector.shape_cast %540 : vector<1x1x16x16xf32> to vector<16x16xf32>
    %542 = vector.shape_cast %539 : vector<16x16xf32> to vector<1x1x16x16xf32>
    tpu.vector_store %arg3[%c0_259, %c0_260, %c0_261, %c0_262], %542 {strides = array<i32>} : memref<1x5x16x16xf32, #tpu.memory_space<vmem>>, vector<1x1x16x16xf32>,
    %543 = vector.broadcast %18 : f32 to vector<16x16xf32>
    %544 = arith.mulf %543, %524 : vector<16x16xf32>
    %c0_263 = arith.constant 0 : index
    %c1_264 = arith.constant 1 : index
    %c0_265 = arith.constant 0 : index
    %c0_266 = arith.constant 0 : index
    %545 = vector.load %arg3[%c0_263, %c1_264, %c0_265, %c0_266] : memref<1x5x16x16xf32, #tpu.memory_space<vmem>>, vector<1x1x16x16xf32>
    %546 = vector.shape_cast %545 : vector<1x1x16x16xf32> to vector<16x16xf32>
    %547 = vector.shape_cast %544 : vector<16x16xf32> to vector<1x1x16x16xf32>
    tpu.vector_store %arg3[%c0_263, %c1_264, %c0_265, %c0_266], %547 {strides = array<i32>} : memref<1x5x16x16xf32, #tpu.memory_space<vmem>>, vector<1x1x16x16xf32>,
    %548 = vector.broadcast %18 : f32 to vector<16x16xf32>
    %549 = arith.mulf %548, %527 : vector<16x16xf32>
    %c0_267 = arith.constant 0 : index
    %c2_268 = arith.constant 2 : index
    %c0_269 = arith.constant 0 : index
    %c0_270 = arith.constant 0 : index
    %550 = vector.load %arg3[%c0_267, %c2_268, %c0_269, %c0_270] : memref<1x5x16x16xf32, #tpu.memory_space<vmem>>, vector<1x1x16x16xf32>
    %551 = vector.shape_cast %550 : vector<1x1x16x16xf32> to vector<16x16xf32>
    %552 = vector.shape_cast %549 : vector<16x16xf32> to vector<1x1x16x16xf32>
    tpu.vector_store %arg3[%c0_267, %c2_268, %c0_269, %c0_270], %552 {strides = array<i32>} : memref<1x5x16x16xf32, #tpu.memory_space<vmem>>, vector<1x1x16x16xf32>,
    %553 = vector.broadcast %18 : f32 to vector<16x16xf32>
    %554 = arith.mulf %553, %530 : vector<16x16xf32>
    %c0_271 = arith.constant 0 : index
    %c3 = arith.constant 3 : index
    %c0_272 = arith.constant 0 : index
    %c0_273 = arith.constant 0 : index
    %555 = vector.load %arg3[%c0_271, %c3, %c0_272, %c0_273] : memref<1x5x16x16xf32, #tpu.memory_space<vmem>>, vector<1x1x16x16xf32>
    %556 = vector.shape_cast %555 : vector<1x1x16x16xf32> to vector<16x16xf32>
    %557 = vector.shape_cast %554 : vector<16x16xf32> to vector<1x1x16x16xf32>
    tpu.vector_store %arg3[%c0_271, %c3, %c0_272, %c0_273], %557 {strides = array<i32>} : memref<1x5x16x16xf32, #tpu.memory_space<vmem>>, vector<1x1x16x16xf32>,
    %cst_274 = arith.constant 0.333333343 : f32
    %558 = vector.broadcast %cst_274 : f32 to vector<16x16xf32>
    %559 = arith.mulf %537, %558 : vector<16x16xf32>
    %560 = vector.broadcast %19 : f32 to vector<16x16xf32>
    %561 = arith.mulf %560, %559 : vector<16x16xf32>
    %c0_275 = arith.constant 0 : index
    %c4 = arith.constant 4 : index
    %c0_276 = arith.constant 0 : index
    %c0_277 = arith.constant 0 : index
    %562 = vector.load %arg3[%c0_275, %c4, %c0_276, %c0_277] : memref<1x5x16x16xf32, #tpu.memory_space<vmem>>, vector<1x1x16x16xf32>
    %563 = vector.shape_cast %562 : vector<1x1x16x16xf32> to vector<16x16xf32>
    %564 = vector.shape_cast %561 : vector<16x16xf32> to vector<1x1x16x16xf32>
    tpu.vector_store %arg3[%c0_275, %c4, %c0_276, %c0_277], %564 {strides = array<i32>} : memref<1x5x16x16xf32, #tpu.memory_space<vmem>>, vector<1x1x16x16xf32>,
    return
  }
  func.func @transform_0(%arg0: i32) -> i32 {
    %c0_i32 = arith.constant 0 : i32
    %c0_i32_0 = arith.constant 0 : i32
    return %c0_i32 : i32
  }
  func.func @transform_1(%arg0: i32) -> (i32, i32, i32, i32) {
    %c0_i32 = arith.constant 0 : i32
    %c0_i32_0 = arith.constant 0 : i32
    %c0_i32_1 = arith.constant 0 : i32
    %c0_i32_2 = arith.constant 0 : i32
    return %arg0, %c0_i32, %c0_i32_0, %c0_i32_1 : i32, i32, i32, i32
  }
  func.func @transform_2(%arg0: i32) -> (i32, i32, i32, i32) {
    %c0_i32 = arith.constant 0 : i32
    %c0_i32_0 = arith.constant 0 : i32
    %c0_i32_1 = arith.constant 0 : i32
    %c0_i32_2 = arith.constant 0 : i32
    return %arg0, %c0_i32, %c0_i32_0, %c0_i32_1 : i32, i32, i32, i32
  }
}

</mosaic_0001>

<llo_original>
// kernel: tpu_custom_call.1
$region0: #{tpu_custom_call.1}
  #allocation0 [shape = 'u32[]', space=smem, size = 0x4, offset = 0x4, fixed_abs, tag = 'smem constant byte address 0x4 - core index']
  #allocation1 [shape = 'u32[144,128]{1,0:T(1,128)}', space=vmem, size = 0x12000, scoped, tag = 'internal scratch']
  #allocation2 [shape = 'f32[3,18,18]{2,1,0:T(8,128)}', space=vmem, size = 0x9000, scoped, tag = 'scratch operand']
  %s0 = inlined_call_operand.hbm [shape: f32[2], index: 0, kind: input, shape index: {}]
  %s1 = inlined_call_operand.hbm [shape: f32[2,3,16,16], index: 1, kind: input, shape index: {}]
  %s2 = inlined_call_operand.hbm [shape: f32[2,5,16,16], index: 2, kind: output, shape index: {}]
  %s3 = sld [smem:[#allocation0]]
  $region53: #{tpu_custom_call.1} parent=0
    _
  %s5 = ssub.s32 1, %s3
  %s6 = scalar_select 0, %s5, %s3
  $region1: #{tpu_custom_call.1} parent=0
    #allocation3 [shape = 'u8[512]{0}', space=smem, size = 0x200, scoped, tag = 'input window, operand 0, single buffered']
    #allocation4 [shape = 's32[2]{0}', space=sflag, size = 0x8, scoped, tag = 'scoped memory for tpu_custom_call.1']
    #allocation5 [shape = 's32[2]{0}', space=sflag, size = 0x8, scoped, tag = 'scoped memory for tpu_custom_call.1']
    #allocation6 [shape = 's32[2]{0}', space=sflag, size = 0x8, scoped, tag = 'scoped memory for tpu_custom_call.1']
    #allocation7 [shape = 'u8[49152]{0}', space=vmem, size = 0xc000, scoped, tag = 'input window, operand 1']
    #allocation8 [shape = 'u8[81920]{0}', space=vmem, size = 0x14000, scoped, tag = 'output window, operand 0']
    %7 = vsyncpa [#allocation6], 0
    %8 = vsyncpa [#allocation4], 0
    %s9 = scalar_lea.sflag [#allocation4], 1
    %10 = vsyncpa %s9, 0
    %11 = vsyncpa [#allocation5], 0
    %s12 = scalar_lea.sflag [#allocation5], 1
    %13 = vsyncpa %s12, 0
    loop: start=0, step=1, limit=4
    $region2: #{tpu_custom_call.1} parent=1 // loop_pre_header
      _
    $region3: #{tpu_custom_call.1} parent=1 // loop_header
      %s15 = sphi 0, %s19
      %p16 = scmp.ge.s32.totalorder %s15, 4
      %s23 = sphi 0, %s23
      %s25 = sphi 0, %s23
      %s26 = sphi 0, %s25
      %s40 = sphi 0, %s26
      %s46 = sphi 0, %s48
      %s49 = sphi 0, %s46
      %s50 = sphi 0, %s49
      %s66 = sphi 0, %s50
      %s72 = sphi 0, %s74
      %s75 = sphi 0, %s72
      %s76 = sphi 0, %s75
      %s92 = sphi 0, %s76
    $region4: #{tpu_custom_call.1} parent=1 // loop_header_branch
      %18 = sbr.rel (%p16) target = $region8
    $region5: #{tpu_custom_call.1} parent=1 // loop_body
      %s20 = ssub.s32 %s15, 1
      %s21 = ssub.s32 %s15, 2
      %s22 = sadd.s32 %s15, 1
      %s24 = sadd.s32 %s23, 1
      %p27 = scmp.eq.s32.totalorder %s15, 1
      %p28 = scmp.ne.s32.totalorder %s23, %s25
      %p29 = scmp.eq.s32.totalorder %s15, 0
      %p30 = por %p28, %p29
      %p31 = scmp.ne.s32.totalorder %s23, %s25
      %p32 = scmp.eq.s32.totalorder %s20, 1
      %p33 = por %p31, %p32
      %p34 = scmp.ne.s32.totalorder %s25, %s26
      %p35 = scmp.eq.s32.totalorder %s20, 0
      %p36 = por %p34, %p35
      %p37 = scmp.ne.s32.totalorder %s25, %s26
      %p38 = scmp.eq.s32.totalorder %s21, 1
      %p39 = por %p37, %p38
      %p41 = scmp.ne.s32.totalorder %s26, %s40
      %p42 = scmp.eq.s32.totalorder %s21, 0
      %p43 = por %p41, %p42
      %s44 = ssub.s32 %s15, %s22
      %p45 = scmp.eq.s32.totalorder %s44, 0
      %s47 = sadd.s32 %s46, 1
      %s48 = scalar_select %p45, %s46, %s47
      %p51 = pneg %p45
      %p52 = scmp.eq.s32.totalorder %s15, 1
      %p53 = por %p51, %p52
      %p54 = scmp.ne.s32.totalorder %s46, %s49
      %p55 = scmp.eq.s32.totalorder %s15, 0
      %p56 = por %p54, %p55
      %p57 = scmp.ne.s32.totalorder %s46, %s49
      %p58 = scmp.eq.s32.totalorder %s20, 1
      %p59 = por %p57, %p58
      %p60 = scmp.ne.s32.totalorder %s49, %s50
      %p61 = scmp.eq.s32.totalorder %s20, 0
      %p62 = por %p60, %p61
      %p63 = scmp.ne.s32.totalorder %s49, %s50
      %p64 = scmp.eq.s32.totalorder %s21, 1
      %p65 = por %p63, %p64
      %p67 = scmp.ne.s32.totalorder %s50, %s66
      %p68 = scmp.eq.s32.totalorder %s21, 0
      %p69 = por %p67, %p68
      %s70 = ssub.s32 %s15, %s22
      %p71 = scmp.eq.s32.totalorder %s70, 0
      %s73 = sadd.s32 %s72, 1
      %s74 = scalar_select %p71, %s72, %s73
      %p77 = pneg %p71
      %p78 = scmp.eq.s32.totalorder %s15, 1
      %p79 = por %p77, %p78
      %p80 = scmp.ne.s32.totalorder %s72, %s75
      %p81 = scmp.eq.s32.totalorder %s15, 0
      %p82 = por %p80, %p81
      %p83 = scmp.ne.s32.totalorder %s72, %s75
      %p84 = scmp.eq.s32.totalorder %s20, 1
      %p85 = por %p83, %p84
      %p86 = scmp.ne.s32.totalorder %s75, %s76
      %p87 = scmp.eq.s32.totalorder %s20, 0
      %p88 = por %p86, %p87
      %p89 = scmp.ne.s32.totalorder %s75, %s76
      %p90 = scmp.eq.s32.totalorder %s21, 1
      %p91 = por %p89, %p90
      %p93 = scmp.ne.s32.totalorder %s76, %s92
      %p94 = scmp.eq.s32.totalorder %s21, 0
      %p95 = por %p93, %p94
      %p96 = scmp.le.s32.totalorder 1, %s15
      %p97 = scmp.lt.s32.totalorder %s15, 3
      %p98 = pnand %p96, %p97
      %p99 = pneg %p98
      // Predicated region
      $region9: #{tpu_custom_call.1} parent=5 // pred_check
        _
      $region10: #{tpu_custom_call.1} parent=5 // pred_check_branch
        %101 = sbr.rel (%p98) target = $region12
      $region11: #{tpu_custom_call.1} parent=5 // pred_region
        %s102 = ssub.s32 %s15, 1
        // Predicated region
        $region13: #{tpu_custom_call.1} parent=11 // pred_check
          %p103 = pneg %p36
        $region14: #{tpu_custom_call.1} parent=11 // pred_check_branch
          %105 = sbr.rel (%p103) target = $region16
        $region15: #{tpu_custom_call.1} parent=11 // pred_region
          %s107 = ssub.s32 16, 16
          %108 = vsyncadd [#allocation6], %s107
          %111 = dma.hbm_to_smem %s0, 16, [#allocation3], [#allocation6]
        $region16: #{tpu_custom_call.1} parent=11 // pred_fallthru
          _
      $region12: #{tpu_custom_call.1} parent=5 // pred_fallthru
        _
      %p112 = scmp.lt.s32.totalorder %s15, 2
      // Predicated region
      $region17: #{tpu_custom_call.1} parent=5 // pred_check
        %p113 = pneg %p112
      $region18: #{tpu_custom_call.1} parent=5 // pred_check_branch
        %115 = sbr.rel (%p113) target = $region20
      $region19: #{tpu_custom_call.1} parent=5 // pred_region
        // Predicated region
        $region21: #{tpu_custom_call.1} parent=19 // pred_check
          %p116 = pneg %p56
        $region22: #{tpu_custom_call.1} parent=19 // pred_check_branch
          %118 = sbr.rel (%p116) target = $region24
        $region23: #{tpu_custom_call.1} parent=19 // pred_region
          %s119 = sand.u32 %s46, 1
          %s120 = scalar_lea.sflag [#allocation4], %s119
          %s121 = sand.u32 %s46, 1
          %s122 = smul.addr %s121, 48
          %s123 = scalar_lea.vmem [#allocation7], %s122
          %s125 = ssub.s32 768, 768
          %126 = vsyncadd %s120, %s125
          %s127 = smul.addr %s15, 6
          %s128 = smul.addr %s127, 128
          %s129 = scalar_lea.hbm %s1, %s128
          %s130 = sshll.u32 %s123, 4
          %s131 = int_to_ptr.vmem [resolvable:$true] %s130
          %136 = dma.hbm_to_vmem [thread:$0]  %s129, 768, %s131, %s120, 128, 128, 8
        $region24: #{tpu_custom_call.1} parent=19 // pred_fallthru
          _
      $region20: #{tpu_custom_call.1} parent=5 // pred_fallthru
        _
      %p137 = scmp.le.s32.totalorder 1, %s15
      %p138 = scmp.lt.s32.totalorder %s15, 3
      %p139 = pnand %p137, %p138
      %p140 = pneg %p139
      // Predicated region
      $region25: #{tpu_custom_call.1} parent=5 // pred_check
        _
      $region26: #{tpu_custom_call.1} parent=5 // pred_check_branch
        %142 = sbr.rel (%p139) target = $region28
      $region27: #{tpu_custom_call.1} parent=5 // pred_region
        %s143 = ssub.s32 %s15, 1
        // Predicated region
        $region29: #{tpu_custom_call.1} parent=27 // pred_check
          %p144 = pneg %p36
        $region30: #{tpu_custom_call.1} parent=27 // pred_check_branch
          %146 = sbr.rel (%p144) target = $region32
        $region31: #{tpu_custom_call.1} parent=27 // pred_region
          %147 = dma.done [#allocation6], 16
        $region32: #{tpu_custom_call.1} parent=27 // pred_fallthru
          _
        %s148 = sand.u32 %s49, 1
        %s149 = scalar_lea.sflag [#allocation4], %s148
        %s150 = sand.u32 %s49, 1
        %s151 = smul.addr %s150, 48
        %s152 = scalar_lea.vmem [#allocation7], %s151
        // Predicated region
        $region33: #{tpu_custom_call.1} parent=27 // pred_check
          %p153 = pneg %p62
        $region34: #{tpu_custom_call.1} parent=27 // pred_check_branch
          %155 = sbr.rel (%p153) target = $region36
        $region35: #{tpu_custom_call.1} parent=27 // pred_region
          %156 = dma.done %s149, 768
        $region36: #{tpu_custom_call.1} parent=27 // pred_fallthru
          _
        %157 = sfence
        %p158 = pneg %p36
        %p159 = pneg %p33
        %s160 = sand.u32 %s49, 1
        %s161 = scalar_lea.sflag [#allocation4], %s160
        %s162 = sand.u32 %s49, 1
        %s163 = smul.addr %s162, 48
        %s164 = scalar_lea.vmem [#allocation7], %s163
        %p165 = pneg %p62
        %p166 = pneg %p59
        %p167 = pneg %p88
        %p168 = pneg %p85
        %s169 = sand.u32 %s75, 1
        %s170 = scalar_lea.sflag [#allocation5], %s169
        %s171 = sand.u32 %s75, 1
        %s172 = smul.addr %s171, 80
        %s173 = scalar_lea.vmem [#allocation8], %s172
        %p174 = scmp.eq.s32.totalorder %s20, 0
        // Predicated region
        $region37: #{tpu_custom_call.1} parent=27 // pred_check
          %p175 = pneg %p174
        $region38: #{tpu_custom_call.1} parent=27 // pred_check_branch
          %177 = sbr.rel (%p175) target = $region40
        $region39: #{tpu_custom_call.1} parent=27 // pred_region
          %vm178 = vcmask 146432
          %179 = vst.msk [vmem:[#allocation2] sm:$0xff] %vm178, 0.0
          %180 = vst.msk [vmem:[#allocation2 + $0x8] sm:$0xff] %vm178, 0.0
          %vm181 = vcmask 140288
          %182 = vst.msk [vmem:[#allocation2 + $0x10] sm:$0x3] %vm181, 0.0
          %183 = vst.msk [vmem:[#allocation2 + $0x18] sm:$0xff] %vm178, 0.0
          %184 = vst.msk [vmem:[#allocation2 + $0x20] sm:$0xff] %vm178, 0.0
          %185 = vst.msk [vmem:[#allocation2 + $0x28] sm:$0x3] %vm181, 0.0
          %186 = vst.msk [vmem:[#allocation2 + $0x30] sm:$0xff] %vm178, 0.0
          %187 = vst.msk [vmem:[#allocation2 + $0x38] sm:$0xff] %vm178, 0.0
          %188 = vst.msk [vmem:[#allocation2 + $0x40] sm:$0x3] %vm181, 0.0
        $region40: #{tpu_custom_call.1} parent=27 // pred_fallthru
          _
        %v189 = vld [vmem:[%s152] sm:$0xff]
        %v190 = vld [vmem:[%s152 + $0x8] sm:$0xff]
        %193 = vrot.lane.b32.xlu0 %v189, 1
        %v194 = vpop.permute.xlu0 %193
        %195 = vrot.lane.b32.xlu0 %v190, 1
        %v196 = vpop.permute.xlu0 %195
        %vm199 = vcmask 138248
        %200 = vst.msk [vmem:[#allocation2 + $0x1] sm:$0xff] %vm199, %v194
        %201 = vst.msk [vmem:[#allocation2 + $0x9] sm:$0xff] %vm199, %v196
        %s202 = scalar_lea.vmem %s152, 16 [#allocation7]
        %v203 = vld [vmem:[%s202] sm:$0xff]
        %v204 = vld [vmem:[%s202 + $0x8] sm:$0xff]
        %207 = vrot.lane.b32.xlu0 %v203, 1
        %v208 = vpop.permute.xlu0 %207
        %209 = vrot.lane.b32.xlu0 %v204, 1
        %v210 = vpop.permute.xlu0 %209
        %s213 = scalar_lea.vmem [#allocation2], 24
        %214 = vst.msk [vmem:[%s213 + $0x1] sm:$0xff] %vm199, %v208
        %215 = vst.msk [vmem:[%s213 + $0x9] sm:$0xff] %vm199, %v210
        %s216 = scalar_lea.vmem %s152, 32 [#allocation7]
        %v217 = vld [vmem:[%s216] sm:$0xff]
        %v218 = vld [vmem:[%s216 + $0x8] sm:$0xff]
        %221 = vrot.lane.b32.xlu0 %v217, 1
        %v222 = vpop.permute.xlu0 %221
        %223 = vrot.lane.b32.xlu0 %v218, 1
        %v224 = vpop.permute.xlu0 %223
        %s227 = scalar_lea.vmem [#allocation2], 48
        %228 = vst.msk [vmem:[%s227 + $0x1] sm:$0xff] %vm199, %v222
        %229 = vst.msk [vmem:[%s227 + $0x9] sm:$0xff] %vm199, %v224
        %s230 = sld [smem:[#allocation3]]
        %s231 = sld [smem:[#allocation3 + $0x1]]
        %v232 = vld [vmem:[#allocation2] sm:$0xff]
        %v233 = vld [vmem:[#allocation2 + $0x8] sm:$0xff]
        %v234 = vmul.f32 %v232, -0.125
        %v235 = vmul.f32 %v233, -0.125
        %v236 = vadd.f32 %v234, 0.0
        %v237 = vadd.f32 %v235, 0.0
        %v238 = vmul.f32 %v232, -0.17842047
        %v239 = vmul.f32 %v233, -0.17842047
        %v240 = vadd.f32 %v238, 0.0
        %v241 = vadd.f32 %v239, 0.0
        %v242 = vmul.f32 %v232, -0.032649957
        %v243 = vmul.f32 %v233, -0.032649957
        %v244 = vadd.f32 %v242, 0.0
        %v245 = vadd.f32 %v243, 0.0
        %v246 = vmul.f32 %v232, 0.25960025
        %v247 = vmul.f32 %v233, 0.25960025
        %v248 = vadd.f32 %v246, 0.0
        %v249 = vadd.f32 %v247, 0.0
        %v250 = vmul.f32 %v232, -0.25
        %v251 = vmul.f32 %v233, -0.25
        %254 = vrot.lane.b32.xlu0 %v250, 127
        %v255 = vpop.permute.xlu0 %254
        %256 = vrot.lane.b32.xlu0 %v251, 127
        %v257 = vpop.permute.xlu0 %256
        %v260 = vadd.f32 %v236, %v255
        %v261 = vadd.f32 %v237, %v257
        %v262 = vmul.f32 %v232, 0.29416564
        %v263 = vmul.f32 %v233, 0.29416564
        %266 = vrot.lane.b32.xlu0 %v262, 127
        %v267 = vpop.permute.xlu0 %266
        %268 = vrot.lane.b32.xlu0 %v263, 127
        %v269 = vpop.permute.xlu0 %268
        %v272 = vadd.f32 %v240, %v267
        %v273 = vadd.f32 %v241, %v269
        %v274 = vmul.f32 %v232, -0.14771317
        %v275 = vmul.f32 %v233, -0.14771317
        %278 = vrot.lane.b32.xlu0 %v274, 127
        %v279 = vpop.permute.xlu0 %278
        %280 = vrot.lane.b32.xlu0 %v275, 127
        %v281 = vpop.permute.xlu0 %280
        %v284 = vadd.f32 %v244, %v279
        %v285 = vadd.f32 %v245, %v281
        %v286 = vmul.f32 %v232, -0.20217688
        %v287 = vmul.f32 %v233, -0.20217688
        %290 = vrot.lane.b32.xlu0 %v286, 127
        %v291 = vpop.permute.xlu0 %290
        %292 = vrot.lane.b32.xlu0 %v287, 127
        %v293 = vpop.permute.xlu0 %292
        %v296 = vadd.f32 %v240, %v291
        %v297 = vadd.f32 %v241, %v293
        %v298 = vadd.f32 %v248, %v279
        %v299 = vadd.f32 %v249, %v281
        %v300 = vmul.f32 %v232, 0.125
        %v301 = vmul.f32 %v233, 0.125
        %304 = vrot.lane.b32.xlu0 %v300, 126
        %v305 = vpop.permute.xlu0 %304
        %306 = vrot.lane.b32.xlu0 %v301, 126
        %v307 = vpop.permute.xlu0 %306
        %v310 = vadd.f32 %v236, %v305
        %v311 = vadd.f32 %v237, %v307
        %314 = vrot.lane.b32.xlu0 %v234, 126
        %v315 = vpop.permute.xlu0 %314
        %316 = vrot.lane.b32.xlu0 %v235, 126
        %v317 = vpop.permute.xlu0 %316
        %v320 = vadd.f32 %v260, %v315
        %v321 = vadd.f32 %v261, %v317
        %324 = vrot.lane.b32.xlu0 %v238, 126
        %v325 = vpop.permute.xlu0 %324
        %326 = vrot.lane.b32.xlu0 %v239, 126
        %v327 = vpop.permute.xlu0 %326
        %v330 = vadd.f32 %v272, %v325
        %v331 = vadd.f32 %v273, %v327
        %334 = vrot.lane.b32.xlu0 %v246, 126
        %v335 = vpop.permute.xlu0 %334
        %336 = vrot.lane.b32.xlu0 %v247, 126
        %v337 = vpop.permute.xlu0 %336
        %v340 = vadd.f32 %v284, %v335
        %v341 = vadd.f32 %v285, %v337
        %v342 = vadd.f32 %v296, %v325
        %v343 = vadd.f32 %v297, %v327
        %346 = vrot.lane.b32.xlu0 %v242, 126
        %v347 = vpop.permute.xlu0 %346
        %348 = vrot.lane.b32.xlu0 %v243, 126
        %v349 = vpop.permute.xlu0 %348
        %v352 = vadd.f32 %v298, %v347
        %v353 = vadd.f32 %v299, %v349
        %v354 = vld [vmem:[#allocation2 + $0x1] sm:$0xff]
        %v355 = vld [vmem:[#allocation2 + $0x9] sm:$0xff]
        %v356 = vmul.f32 %v354, -0.25
        %v357 = vmul.f32 %v355, -0.25
        %v358 = vadd.f32 %v310, %v356
        %v359 = vadd.f32 %v311, %v357
        %v360 = vmul.f32 %v354, -0.20217688
        %v361 = vmul.f32 %v355, -0.20217688
        %v362 = vadd.f32 %v330, %v360
        %v363 = vadd.f32 %v331, %v361
        %v364 = vmul.f32 %v354, -0.14771317
        %v365 = vmul.f32 %v355, -0.14771317
        %v366 = vadd.f32 %v340, %v364
        %v367 = vadd.f32 %v341, %v365
        %v368 = vmul.f32 %v354, 0.29416564
        %v369 = vmul.f32 %v355, 0.29416564
        %v370 = vadd.f32 %v342, %v368
        %v371 = vadd.f32 %v343, %v369
        %v372 = vadd.f32 %v352, %v364
        %v373 = vadd.f32 %v353, %v365
        %v374 = vmul.f32 %v354, 0.33333334
        %v375 = vmul.f32 %v355, 0.33333334
        %378 = vrot.lane.b32.xlu0 %v374, 127
        %v379 = vpop.permute.xlu0 %378
        %380 = vrot.lane.b32.xlu0 %v375, 127
        %v381 = vpop.permute.xlu0 %380
        %v384 = vadd.f32 %v362, %v379
        %v385 = vadd.f32 %v363, %v381
        %v386 = vadd.f32 %v366, %v379
        %v387 = vadd.f32 %v367, %v381
        %v388 = vadd.f32 %v370, %v379
        %v389 = vadd.f32 %v371, %v381
        %v390 = vadd.f32 %v372, %v379
        %v391 = vadd.f32 %v373, %v381
        %v392 = vmul.f32 %v354, 0.25
        %v393 = vmul.f32 %v355, 0.25
        %396 = vrot.lane.b32.xlu0 %v392, 126
        %v397 = vpop.permute.xlu0 %396
        %398 = vrot.lane.b32.xlu0 %v393, 126
        %v399 = vpop.permute.xlu0 %398
        %v402 = vadd.f32 %v358, %v397
        %v403 = vadd.f32 %v359, %v399
        %406 = vrot.lane.b32.xlu0 %v360, 126
        %v407 = vpop.permute.xlu0 %406
        %408 = vrot.lane.b32.xlu0 %v361, 126
        %v409 = vpop.permute.xlu0 %408
        %v412 = vadd.f32 %v384, %v407
        %v413 = vadd.f32 %v385, %v409
        %416 = vrot.lane.b32.xlu0 %v364, 126
        %v417 = vpop.permute.xlu0 %416
        %418 = vrot.lane.b32.xlu0 %v365, 126
        %v419 = vpop.permute.xlu0 %418
        %v422 = vadd.f32 %v386, %v417
        %v423 = vadd.f32 %v387, %v419
        %426 = vrot.lane.b32.xlu0 %v368, 126
        %v427 = vpop.permute.xlu0 %426
        %428 = vrot.lane.b32.xlu0 %v369, 126
        %v429 = vpop.permute.xlu0 %428
        %v432 = vadd.f32 %v388, %v427
        %v433 = vadd.f32 %v389, %v429
        %v434 = vadd.f32 %v390, %v417
        %v435 = vadd.f32 %v391, %v419
        %v436 = vld [vmem:[#allocation2 + $0x2] sm:$0xff]
        %v437 = vld [vmem:[#allocation2 + $0xa] sm:$0xff]
        %v438 = vmul.f32 %v436, -0.125
        %v439 = vmul.f32 %v437, -0.125
        %v440 = vadd.f32 %v402, %v438
        %v441 = vadd.f32 %v403, %v439
        %v442 = vmul.f32 %v436, 0.125
        %v443 = vmul.f32 %v437, 0.125
        %v444 = vadd.f32 %v320, %v442
        %v445 = vadd.f32 %v321, %v443
        %v446 = vmul.f32 %v436, -0.17842047
        %v447 = vmul.f32 %v437, -0.17842047
        %v448 = vadd.f32 %v412, %v446
        %v449 = vadd.f32 %v413, %v447
        %v450 = vmul.f32 %v436, 0.25960025
        %v451 = vmul.f32 %v437, 0.25960025
        %v452 = vadd.f32 %v422, %v450
        %v453 = vadd.f32 %v423, %v451
        %v454 = vadd.f32 %v432, %v446
        %v455 = vadd.f32 %v433, %v447
        %v456 = vmul.f32 %v436, -0.032649957
        %v457 = vmul.f32 %v437, -0.032649957
        %v458 = vadd.f32 %v434, %v456
        %v459 = vadd.f32 %v435, %v457
        %v460 = vmul.f32 %v436, 0.25
        %v461 = vmul.f32 %v437, 0.25
        %464 = vrot.lane.b32.xlu0 %v460, 127
        %v465 = vpop.permute.xlu0 %464
        %466 = vrot.lane.b32.xlu0 %v461, 127
        %v467 = vpop.permute.xlu0 %466
        %v470 = vadd.f32 %v444, %v465
        %v471 = vadd.f32 %v445, %v467
        %v472 = vmul.f32 %v436, 0.29416564
        %v473 = vmul.f32 %v437, 0.29416564
        %476 = vrot.lane.b32.xlu0 %v472, 127
        %v477 = vpop.permute.xlu0 %476
        %478 = vrot.lane.b32.xlu0 %v473, 127
        %v479 = vpop.permute.xlu0 %478
        %v482 = vadd.f32 %v448, %v477
        %v483 = vadd.f32 %v449, %v479
        %v484 = vmul.f32 %v436, -0.14771317
        %v485 = vmul.f32 %v437, -0.14771317
        %488 = vrot.lane.b32.xlu0 %v484, 127
        %v489 = vpop.permute.xlu0 %488
        %490 = vrot.lane.b32.xlu0 %v485, 127
        %v491 = vpop.permute.xlu0 %490
        %v494 = vadd.f32 %v452, %v489
        %v495 = vadd.f32 %v453, %v491
        %v496 = vmul.f32 %v436, -0.20217688
        %v497 = vmul.f32 %v437, -0.20217688
        %500 = vrot.lane.b32.xlu0 %v496, 127
        %v501 = vpop.permute.xlu0 %500
        %502 = vrot.lane.b32.xlu0 %v497, 127
        %v503 = vpop.permute.xlu0 %502
        %v506 = vadd.f32 %v454, %v501
        %v507 = vadd.f32 %v455, %v503
        %v508 = vadd.f32 %v458, %v489
        %v509 = vadd.f32 %v459, %v491
        %512 = vrot.lane.b32.xlu0 %v442, 126
        %v513 = vpop.permute.xlu0 %512
        %514 = vrot.lane.b32.xlu0 %v443, 126
        %v515 = vpop.permute.xlu0 %514
        %v518 = vadd.f32 %v440, %v513
        %v519 = vadd.f32 %v441, %v515
        %v520 = vadd.f32 %v470, %v513
        %v521 = vadd.f32 %v471, %v515
        %524 = vrot.lane.b32.xlu0 %v446, 126
        %v525 = vpop.permute.xlu0 %524
        %526 = vrot.lane.b32.xlu0 %v447, 126
        %v527 = vpop.permute.xlu0 %526
        %v530 = vadd.f32 %v482, %v525
        %v531 = vadd.f32 %v483, %v527
        %534 = vrot.lane.b32.xlu0 %v456, 126
        %v535 = vpop.permute.xlu0 %534
        %536 = vrot.lane.b32.xlu0 %v457, 126
        %v537 = vpop.permute.xlu0 %536
        %v540 = vadd.f32 %v494, %v535
        %v541 = vadd.f32 %v495, %v537
        %v542 = vadd.f32 %v506, %v525
        %v543 = vadd.f32 %v507, %v527
        %546 = vrot.lane.b32.xlu0 %v450, 126
        %v547 = vpop.permute.xlu0 %546
        %548 = vrot.lane.b32.xlu0 %v451, 126
        %v549 = vpop.permute.xlu0 %548
        %v552 = vadd.f32 %v508, %v547
        %v553 = vadd.f32 %v509, %v549
        %v554 = vmul.f32 %v518, %v518
        %v555 = vmul.f32 %v519, %v519
        %v556 = vmul.f32 %v520, %v520
        %v557 = vmul.f32 %v521, %v521
        %v558 = vadd.f32 %v554, %v556
        %v559 = vadd.f32 %v555, %v557
        %v560 = vadd.f32 %v558, 1e-12
        %v561 = vadd.f32 %v559, 1e-12
        %v562 = vrsqrt.pop %v560
        %v563 = vmul.f32 %v560, %v562
        %vm564 = vcmp.eq.f32.partialorder %v560, inf
        %v565 = vsel %vm564, %v560, %v563
        %vm566 = vcmp.eq.f32.partialorder %v560, 0.0
        %v567 = vand.u32 %v560, 2147483648
        %v568 = vsel %vm566, %v567, %v565
        %v569 = vrsqrt.pop %v561
        %v570 = vmul.f32 %v561, %v569
        %vm571 = vcmp.eq.f32.partialorder %v561, inf
        %v572 = vsel %vm571, %v561, %v570
        %vm573 = vcmp.eq.f32.partialorder %v561, 0.0
        %v574 = vand.u32 %v561, 2147483648
        %v575 = vsel %vm573, %v574, %v572
        %v576 = vadd.f32 %v568, 0.0
        %v577 = vadd.f32 %v575, 0.0
        %v578 = vld [vmem:[%s213] sm:$0xff]
        %v579 = vld [vmem:[%s213 + $0x8] sm:$0xff]
        %v580 = vmul.f32 %v578, -0.125
        %v581 = vmul.f32 %v579, -0.125
        %v582 = vadd.f32 %v580, 0.0
        %v583 = vadd.f32 %v581, 0.0
        %v584 = vmul.f32 %v578, -0.17842047
        %v585 = vmul.f32 %v579, -0.17842047
        %v586 = vadd.f32 %v530, %v584
        %v587 = vadd.f32 %v531, %v585
        %v588 = vmul.f32 %v578, -0.032649957
        %v589 = vmul.f32 %v579, -0.032649957
        %v590 = vadd.f32 %v540, %v588
        %v591 = vadd.f32 %v541, %v589
        %v592 = vadd.f32 %v542, %v584
        %v593 = vadd.f32 %v543, %v585
        %v594 = vmul.f32 %v578, 0.25960025
        %v595 = vmul.f32 %v579, 0.25960025
        %v596 = vadd.f32 %v552, %v594
        %v597 = vadd.f32 %v553, %v595
        %v598 = vmul.f32 %v578, -0.25
        %v599 = vmul.f32 %v579, -0.25
        %602 = vrot.lane.b32.xlu0 %v598, 127
        %v603 = vpop.permute.xlu0 %602
        %604 = vrot.lane.b32.xlu0 %v599, 127
        %v605 = vpop.permute.xlu0 %604
        %v608 = vadd.f32 %v582, %v603
        %v609 = vadd.f32 %v583, %v605
        %v610 = vmul.f32 %v578, 0.29416564
        %v611 = vmul.f32 %v579, 0.29416564
        %614 = vrot.lane.b32.xlu0 %v610, 127
        %v615 = vpop.permute.xlu0 %614
        %616 = vrot.lane.b32.xlu0 %v611, 127
        %v617 = vpop.permute.xlu0 %616
        %v620 = vadd.f32 %v586, %v615
        %v621 = vadd.f32 %v587, %v617
        %v622 = vmul.f32 %v578, -0.14771317
        %v623 = vmul.f32 %v579, -0.14771317
        %626 = vrot.lane.b32.xlu0 %v622, 127
        %v627 = vpop.permute.xlu0 %626
        %628 = vrot.lane.b32.xlu0 %v623, 127
        %v629 = vpop.permute.xlu0 %628
        %v632 = vadd.f32 %v590, %v627
        %v633 = vadd.f32 %v591, %v629
        %v634 = vmul.f32 %v578, -0.20217688
        %v635 = vmul.f32 %v579, -0.20217688
        %638 = vrot.lane.b32.xlu0 %v634, 127
        %v639 = vpop.permute.xlu0 %638
        %640 = vrot.lane.b32.xlu0 %v635, 127
        %v641 = vpop.permute.xlu0 %640
        %v644 = vadd.f32 %v592, %v639
        %v645 = vadd.f32 %v593, %v641
        %v646 = vadd.f32 %v596, %v627
        %v647 = vadd.f32 %v597, %v629
        %v648 = vmul.f32 %v578, 0.125
        %v649 = vmul.f32 %v579, 0.125
        %652 = vrot.lane.b32.xlu0 %v648, 126
        %v653 = vpop.permute.xlu0 %652
        %654 = vrot.lane.b32.xlu0 %v649, 126
        %v655 = vpop.permute.xlu0 %654
        %v658 = vadd.f32 %v582, %v653
        %v659 = vadd.f32 %v583, %v655
        %662 = vrot.lane.b32.xlu0 %v580, 126
        %v663 = vpop.permute.xlu0 %662
        %664 = vrot.lane.b32.xlu0 %v581, 126
        %v665 = vpop.permute.xlu0 %664
        %v668 = vadd.f32 %v608, %v663
        %v669 = vadd.f32 %v609, %v665
        %672 = vrot.lane.b32.xlu0 %v584, 126
        %v673 = vpop.permute.xlu0 %672
        %674 = vrot.lane.b32.xlu0 %v585, 126
        %v675 = vpop.permute.xlu0 %674
        %v678 = vadd.f32 %v620, %v673
        %v679 = vadd.f32 %v621, %v675
        %682 = vrot.lane.b32.xlu0 %v594, 126
        %v683 = vpop.permute.xlu0 %682
        %684 = vrot.lane.b32.xlu0 %v595, 126
        %v685 = vpop.permute.xlu0 %684
        %v688 = vadd.f32 %v632, %v683
        %v689 = vadd.f32 %v633, %v685
        %v690 = vadd.f32 %v644, %v673
        %v691 = vadd.f32 %v645, %v675
        %694 = vrot.lane.b32.xlu0 %v588, 126
        %v695 = vpop.permute.xlu0 %694
        %696 = vrot.lane.b32.xlu0 %v589, 126
        %v697 = vpop.permute.xlu0 %696
        %v700 = vadd.f32 %v646, %v695
        %v701 = vadd.f32 %v647, %v697
        %v702 = vld [vmem:[%s213 + $0x1] sm:$0xff]
        %v703 = vld [vmem:[%s213 + $0x9] sm:$0xff]
        %v704 = vmul.f32 %v702, -0.25
        %v705 = vmul.f32 %v703, -0.25
        %v706 = vadd.f32 %v658, %v704
        %v707 = vadd.f32 %v659, %v705
        %v708 = vmul.f32 %v702, -0.20217688
        %v709 = vmul.f32 %v703, -0.20217688
        %v710 = vadd.f32 %v678, %v708
        %v711 = vadd.f32 %v679, %v709
        %v712 = vmul.f32 %v702, -0.14771317
        %v713 = vmul.f32 %v703, -0.14771317
        %v714 = vadd.f32 %v688, %v712
        %v715 = vadd.f32 %v689, %v713
        %v716 = vmul.f32 %v702, 0.29416564
        %v717 = vmul.f32 %v703, 0.29416564
        %v718 = vadd.f32 %v690, %v716
        %v719 = vadd.f32 %v691, %v717
        %v720 = vadd.f32 %v700, %v712
        %v721 = vadd.f32 %v701, %v713
        %v722 = vmul.f32 %v702, 0.33333334
        %v723 = vmul.f32 %v703, 0.33333334
        %726 = vrot.lane.b32.xlu0 %v722, 127
        %v727 = vpop.permute.xlu0 %726
        %728 = vrot.lane.b32.xlu0 %v723, 127
        %v729 = vpop.permute.xlu0 %728
        %v732 = vadd.f32 %v710, %v727
        %v733 = vadd.f32 %v711, %v729
        %v734 = vadd.f32 %v714, %v727
        %v735 = vadd.f32 %v715, %v729
        %v736 = vadd.f32 %v718, %v727
        %v737 = vadd.f32 %v719, %v729
        %v738 = vadd.f32 %v720, %v727
        %v739 = vadd.f32 %v721, %v729
        %v740 = vmul.f32 %v702, 0.25
        %v741 = vmul.f32 %v703, 0.25
        %744 = vrot.lane.b32.xlu0 %v740, 126
        %v745 = vpop.permute.xlu0 %744
        %746 = vrot.lane.b32.xlu0 %v741, 126
        %v747 = vpop.permute.xlu0 %746
        %v750 = vadd.f32 %v706, %v745
        %v751 = vadd.f32 %v707, %v747
        %754 = vrot.lane.b32.xlu0 %v708, 126
        %v755 = vpop.permute.xlu0 %754
        %756 = vrot.lane.b32.xlu0 %v709, 126
        %v757 = vpop.permute.xlu0 %756
        %v760 = vadd.f32 %v732, %v755
        %v761 = vadd.f32 %v733, %v757
        %764 = vrot.lane.b32.xlu0 %v712, 126
        %v765 = vpop.permute.xlu0 %764
        %766 = vrot.lane.b32.xlu0 %v713, 126
        %v767 = vpop.permute.xlu0 %766
        %v770 = vadd.f32 %v734, %v765
        %v771 = vadd.f32 %v735, %v767
        %774 = vrot.lane.b32.xlu0 %v716, 126
        %v775 = vpop.permute.xlu0 %774
        %776 = vrot.lane.b32.xlu0 %v717, 126
        %v777 = vpop.permute.xlu0 %776
        %v780 = vadd.f32 %v736, %v775
        %v781 = vadd.f32 %v737, %v777
        %v782 = vadd.f32 %v738, %v765
        %v783 = vadd.f32 %v739, %v767
        %v784 = vld [vmem:[%s213 + $0x2] sm:$0xff]
        %v785 = vld [vmem:[%s213 + $0xa] sm:$0xff]
        %v786 = vmul.f32 %v784, -0.125
        %v787 = vmul.f32 %v785, -0.125
        %v788 = vadd.f32 %v750, %v786
        %v789 = vadd.f32 %v751, %v787
        %v790 = vmul.f32 %v784, 0.125
        %v791 = vmul.f32 %v785, 0.125
        %v792 = vadd.f32 %v668, %v790
        %v793 = vadd.f32 %v669, %v791
        %v794 = vmul.f32 %v784, -0.17842047
        %v795 = vmul.f32 %v785, -0.17842047
        %v796 = vadd.f32 %v760, %v794
        %v797 = vadd.f32 %v761, %v795
        %v798 = vmul.f32 %v784, 0.25960025
        %v799 = vmul.f32 %v785, 0.25960025
        %v800 = vadd.f32 %v770, %v798
        %v801 = vadd.f32 %v771, %v799
        %v802 = vadd.f32 %v780, %v794
        %v803 = vadd.f32 %v781, %v795
        %v804 = vmul.f32 %v784, -0.032649957
        %v805 = vmul.f32 %v785, -0.032649957
        %v806 = vadd.f32 %v782, %v804
        %v807 = vadd.f32 %v783, %v805
        %v808 = vmul.f32 %v784, 0.25
        %v809 = vmul.f32 %v785, 0.25
        %812 = vrot.lane.b32.xlu0 %v808, 127
        %v813 = vpop.permute.xlu0 %812
        %814 = vrot.lane.b32.xlu0 %v809, 127
        %v815 = vpop.permute.xlu0 %814
        %v818 = vadd.f32 %v792, %v813
        %v819 = vadd.f32 %v793, %v815
        %v820 = vmul.f32 %v784, 0.29416564
        %v821 = vmul.f32 %v785, 0.29416564
        %824 = vrot.lane.b32.xlu0 %v820, 127
        %v825 = vpop.permute.xlu0 %824
        %826 = vrot.lane.b32.xlu0 %v821, 127
        %v827 = vpop.permute.xlu0 %826
        %v830 = vadd.f32 %v796, %v825
        %v831 = vadd.f32 %v797, %v827
        %v832 = vmul.f32 %v784, -0.14771317
        %v833 = vmul.f32 %v785, -0.14771317
        %836 = vrot.lane.b32.xlu0 %v832, 127
        %v837 = vpop.permute.xlu0 %836
        %838 = vrot.lane.b32.xlu0 %v833, 127
        %v839 = vpop.permute.xlu0 %838
        %v842 = vadd.f32 %v800, %v837
        %v843 = vadd.f32 %v801, %v839
        %v844 = vmul.f32 %v784, -0.20217688
        %v845 = vmul.f32 %v785, -0.20217688
        %848 = vrot.lane.b32.xlu0 %v844, 127
        %v849 = vpop.permute.xlu0 %848
        %850 = vrot.lane.b32.xlu0 %v845, 127
        %v851 = vpop.permute.xlu0 %850
        %v854 = vadd.f32 %v802, %v849
        %v855 = vadd.f32 %v803, %v851
        %v856 = vadd.f32 %v806, %v837
        %v857 = vadd.f32 %v807, %v839
        %860 = vrot.lane.b32.xlu0 %v790, 126
        %v861 = vpop.permute.xlu0 %860
        %862 = vrot.lane.b32.xlu0 %v791, 126
        %v863 = vpop.permute.xlu0 %862
        %v866 = vadd.f32 %v788, %v861
        %v867 = vadd.f32 %v789, %v863
        %v868 = vadd.f32 %v818, %v861
        %v869 = vadd.f32 %v819, %v863
        %872 = vrot.lane.b32.xlu0 %v794, 126
        %v873 = vpop.permute.xlu0 %872
        %874 = vrot.lane.b32.xlu0 %v795, 126
        %v875 = vpop.permute.xlu0 %874
        %v878 = vadd.f32 %v830, %v873
        %v879 = vadd.f32 %v831, %v875
        %882 = vrot.lane.b32.xlu0 %v804, 126
        %v883 = vpop.permute.xlu0 %882
        %884 = vrot.lane.b32.xlu0 %v805, 126
        %v885 = vpop.permute.xlu0 %884
        %v888 = vadd.f32 %v842, %v883
        %v889 = vadd.f32 %v843, %v885
        %v890 = vadd.f32 %v854, %v873
        %v891 = vadd.f32 %v855, %v875
        %894 = vrot.lane.b32.xlu0 %v798, 126
        %v895 = vpop.permute.xlu0 %894
        %896 = vrot.lane.b32.xlu0 %v799, 126
        %v897 = vpop.permute.xlu0 %896
        %v900 = vadd.f32 %v856, %v895
        %v901 = vadd.f32 %v857, %v897
        %v902 = vmul.f32 %v866, %v866
        %v903 = vmul.f32 %v867, %v867
        %v904 = vmul.f32 %v868, %v868
        %v905 = vmul.f32 %v869, %v869
        %v906 = vadd.f32 %v902, %v904
        %v907 = vadd.f32 %v903, %v905
        %v908 = vadd.f32 %v906, 1e-12
        %v909 = vadd.f32 %v907, 1e-12
        %v910 = vrsqrt.pop %v908
        %v911 = vmul.f32 %v908, %v910
        %vm912 = vcmp.eq.f32.partialorder %v908, inf
        %v913 = vsel %vm912, %v908, %v911
        %vm914 = vcmp.eq.f32.partialorder %v908, 0.0
        %v915 = vand.u32 %v908, 2147483648
        %v916 = vsel %vm914, %v915, %v913
        %v917 = vrsqrt.pop %v909
        %v918 = vmul.f32 %v909, %v917
        %vm919 = vcmp.eq.f32.partialorder %v909, inf
        %v920 = vsel %vm919, %v909, %v918
        %vm921 = vcmp.eq.f32.partialorder %v909, 0.0
        %v922 = vand.u32 %v909, 2147483648
        %v923 = vsel %vm921, %v922, %v920
        %v924 = vadd.f32 %v576, %v916
        %v925 = vadd.f32 %v577, %v923
        %v926 = vld [vmem:[%s227] sm:$0xff]
        %v927 = vld [vmem:[%s227 + $0x8] sm:$0xff]
        %v928 = vmul.f32 %v926, -0.125
        %v929 = vmul.f32 %v927, -0.125
        %v930 = vadd.f32 %v928, 0.0
        %v931 = vadd.f32 %v929, 0.0
        %v932 = vmul.f32 %v926, -0.17842047
        %v933 = vmul.f32 %v927, -0.17842047
        %v934 = vadd.f32 %v878, %v932
        %v935 = vadd.f32 %v879, %v933
        %v936 = vmul.f32 %v926, -0.032649957
        %v937 = vmul.f32 %v927, -0.032649957
        %v938 = vadd.f32 %v888, %v936
        %v939 = vadd.f32 %v889, %v937
        %v940 = vadd.f32 %v890, %v932
        %v941 = vadd.f32 %v891, %v933
        %v942 = vmul.f32 %v926, 0.25960025
        %v943 = vmul.f32 %v927, 0.25960025
        %v944 = vadd.f32 %v900, %v942
        %v945 = vadd.f32 %v901, %v943
        %v946 = vmul.f32 %v926, -0.25
        %v947 = vmul.f32 %v927, -0.25
        %950 = vrot.lane.b32.xlu0 %v946, 127
        %v951 = vpop.permute.xlu0 %950
        %952 = vrot.lane.b32.xlu0 %v947, 127
        %v953 = vpop.permute.xlu0 %952
        %v956 = vadd.f32 %v930, %v951
        %v957 = vadd.f32 %v931, %v953
        %v958 = vmul.f32 %v926, 0.29416564
        %v959 = vmul.f32 %v927, 0.29416564
        %962 = vrot.lane.b32.xlu0 %v958, 127
        %v963 = vpop.permute.xlu0 %962
        %964 = vrot.lane.b32.xlu0 %v959, 127
        %v965 = vpop.permute.xlu0 %964
        %v968 = vadd.f32 %v934, %v963
        %v969 = vadd.f32 %v935, %v965
        %v970 = vmul.f32 %v926, -0.14771317
        %v971 = vmul.f32 %v927, -0.14771317
        %974 = vrot.lane.b32.xlu0 %v970, 127
        %v975 = vpop.permute.xlu0 %974
        %976 = vrot.lane.b32.xlu0 %v971, 127
        %v977 = vpop.permute.xlu0 %976
        %v980 = vadd.f32 %v938, %v975
        %v981 = vadd.f32 %v939, %v977
        %v982 = vmul.f32 %v926, -0.20217688
        %v983 = vmul.f32 %v927, -0.20217688
        %986 = vrot.lane.b32.xlu0 %v982, 127
        %v987 = vpop.permute.xlu0 %986
        %988 = vrot.lane.b32.xlu0 %v983, 127
        %v989 = vpop.permute.xlu0 %988
        %v992 = vadd.f32 %v940, %v987
        %v993 = vadd.f32 %v941, %v989
        %v994 = vadd.f32 %v944, %v975
        %v995 = vadd.f32 %v945, %v977
        %v996 = vmul.f32 %v926, 0.125
        %v997 = vmul.f32 %v927, 0.125
        %1000 = vrot.lane.b32.xlu0 %v996, 126
        %v1001 = vpop.permute.xlu0 %1000
        %1002 = vrot.lane.b32.xlu0 %v997, 126
        %v1003 = vpop.permute.xlu0 %1002
        %v1006 = vadd.f32 %v930, %v1001
        %v1007 = vadd.f32 %v931, %v1003
        %1010 = vrot.lane.b32.xlu0 %v928, 126
        %v1011 = vpop.permute.xlu0 %1010
        %1012 = vrot.lane.b32.xlu0 %v929, 126
        %v1013 = vpop.permute.xlu0 %1012
        %v1016 = vadd.f32 %v956, %v1011
        %v1017 = vadd.f32 %v957, %v1013
        %1020 = vrot.lane.b32.xlu0 %v932, 126
        %v1021 = vpop.permute.xlu0 %1020
        %1022 = vrot.lane.b32.xlu0 %v933, 126
        %v1023 = vpop.permute.xlu0 %1022
        %v1026 = vadd.f32 %v968, %v1021
        %v1027 = vadd.f32 %v969, %v1023
        %1030 = vrot.lane.b32.xlu0 %v942, 126
        %v1031 = vpop.permute.xlu0 %1030
        %1032 = vrot.lane.b32.xlu0 %v943, 126
        %v1033 = vpop.permute.xlu0 %1032
        %v1036 = vadd.f32 %v980, %v1031
        %v1037 = vadd.f32 %v981, %v1033
        %v1038 = vadd.f32 %v992, %v1021
        %v1039 = vadd.f32 %v993, %v1023
        %1042 = vrot.lane.b32.xlu0 %v936, 126
        %v1043 = vpop.permute.xlu0 %1042
        %1044 = vrot.lane.b32.xlu0 %v937, 126
        %v1045 = vpop.permute.xlu0 %1044
        %v1048 = vadd.f32 %v994, %v1043
        %v1049 = vadd.f32 %v995, %v1045
        %v1050 = vld [vmem:[%s227 + $0x1] sm:$0xff]
        %v1051 = vld [vmem:[%s227 + $0x9] sm:$0xff]
        %v1052 = vmul.f32 %v1050, -0.25
        %v1053 = vmul.f32 %v1051, -0.25
        %v1054 = vadd.f32 %v1006, %v1052
        %v1055 = vadd.f32 %v1007, %v1053
        %v1056 = vmul.f32 %v1050, -0.20217688
        %v1057 = vmul.f32 %v1051, -0.20217688
        %v1058 = vadd.f32 %v1026, %v1056
        %v1059 = vadd.f32 %v1027, %v1057
        %v1060 = vmul.f32 %v1050, -0.14771317
        %v1061 = vmul.f32 %v1051, -0.14771317
        %v1062 = vadd.f32 %v1036, %v1060
        %v1063 = vadd.f32 %v1037, %v1061
        %v1064 = vmul.f32 %v1050, 0.29416564
        %v1065 = vmul.f32 %v1051, 0.29416564
        %v1066 = vadd.f32 %v1038, %v1064
        %v1067 = vadd.f32 %v1039, %v1065
        %v1068 = vadd.f32 %v1048, %v1060
        %v1069 = vadd.f32 %v1049, %v1061
        %v1070 = vmul.f32 %v1050, 0.33333334
        %v1071 = vmul.f32 %v1051, 0.33333334
        %1074 = vrot.lane.b32.xlu0 %v1070, 127
        %v1075 = vpop.permute.xlu0 %1074
        %1076 = vrot.lane.b32.xlu0 %v1071, 127
        %v1077 = vpop.permute.xlu0 %1076
        %v1080 = vadd.f32 %v1058, %v1075
        %v1081 = vadd.f32 %v1059, %v1077
        %v1082 = vadd.f32 %v1062, %v1075
        %v1083 = vadd.f32 %v1063, %v1077
        %v1084 = vadd.f32 %v1066, %v1075
        %v1085 = vadd.f32 %v1067, %v1077
        %v1086 = vadd.f32 %v1068, %v1075
        %v1087 = vadd.f32 %v1069, %v1077
        %v1088 = vmul.f32 %v1050, 0.25
        %v1089 = vmul.f32 %v1051, 0.25
        %1092 = vrot.lane.b32.xlu0 %v1088, 126
        %v1093 = vpop.permute.xlu0 %1092
        %1094 = vrot.lane.b32.xlu0 %v1089, 126
        %v1095 = vpop.permute.xlu0 %1094
        %v1098 = vadd.f32 %v1054, %v1093
        %v1099 = vadd.f32 %v1055, %v1095
        %1102 = vrot.lane.b32.xlu0 %v1056, 126
        %v1103 = vpop.permute.xlu0 %1102
        %1104 = vrot.lane.b32.xlu0 %v1057, 126
        %v1105 = vpop.permute.xlu0 %1104
        %v1108 = vadd.f32 %v1080, %v1103
        %v1109 = vadd.f32 %v1081, %v1105
        %1112 = vrot.lane.b32.xlu0 %v1060, 126
        %v1113 = vpop.permute.xlu0 %1112
        %1114 = vrot.lane.b32.xlu0 %v1061, 126
        %v1115 = vpop.permute.xlu0 %1114
        %v1118 = vadd.f32 %v1082, %v1113
        %v1119 = vadd.f32 %v1083, %v1115
        %1122 = vrot.lane.b32.xlu0 %v1064, 126
        %v1123 = vpop.permute.xlu0 %1122
        %1124 = vrot.lane.b32.xlu0 %v1065, 126
        %v1125 = vpop.permute.xlu0 %1124
        %v1128 = vadd.f32 %v1084, %v1123
        %v1129 = vadd.f32 %v1085, %v1125
        %v1130 = vadd.f32 %v1086, %v1113
        %v1131 = vadd.f32 %v1087, %v1115
        %v1132 = vld [vmem:[%s227 + $0x2] sm:$0xff]
        %v1133 = vld [vmem:[%s227 + $0xa] sm:$0xff]
        %v1134 = vmul.f32 %v1132, -0.125
        %v1135 = vmul.f32 %v1133, -0.125
        %v1136 = vadd.f32 %v1098, %v1134
        %v1137 = vadd.f32 %v1099, %v1135
        %v1138 = vmul.f32 %v1132, 0.125
        %v1139 = vmul.f32 %v1133, 0.125
        %v1140 = vadd.f32 %v1016, %v1138
        %v1141 = vadd.f32 %v1017, %v1139
        %v1142 = vmul.f32 %v1132, -0.17842047
        %v1143 = vmul.f32 %v1133, -0.17842047
        %v1144 = vadd.f32 %v1108, %v1142
        %v1145 = vadd.f32 %v1109, %v1143
        %v1146 = vmul.f32 %v1132, 0.25960025
        %v1147 = vmul.f32 %v1133, 0.25960025
        %v1148 = vadd.f32 %v1118, %v1146
        %v1149 = vadd.f32 %v1119, %v1147
        %v1150 = vadd.f32 %v1128, %v1142
        %v1151 = vadd.f32 %v1129, %v1143
        %v1152 = vmul.f32 %v1132, -0.032649957
        %v1153 = vmul.f32 %v1133, -0.032649957
        %v1154 = vadd.f32 %v1130, %v1152
        %v1155 = vadd.f32 %v1131, %v1153
        %v1156 = vmul.f32 %v1132, 0.25
        %v1157 = vmul.f32 %v1133, 0.25
        %1160 = vrot.lane.b32.xlu0 %v1156, 127
        %v1161 = vpop.permute.xlu0 %1160
        %1162 = vrot.lane.b32.xlu0 %v1157, 127
        %v1163 = vpop.permute.xlu0 %1162
        %v1166 = vadd.f32 %v1140, %v1161
        %v1167 = vadd.f32 %v1141, %v1163
        %v1168 = vmul.f32 %v1132, 0.29416564
        %v1169 = vmul.f32 %v1133, 0.29416564
        %1172 = vrot.lane.b32.xlu0 %v1168, 127
        %v1173 = vpop.permute.xlu0 %1172
        %1174 = vrot.lane.b32.xlu0 %v1169, 127
        %v1175 = vpop.permute.xlu0 %1174
        %v1178 = vadd.f32 %v1144, %v1173
        %v1179 = vadd.f32 %v1145, %v1175
        %v1180 = vmul.f32 %v1132, -0.14771317
        %v1181 = vmul.f32 %v1133, -0.14771317
        %1184 = vrot.lane.b32.xlu0 %v1180, 127
        %v1185 = vpop.permute.xlu0 %1184
        %1186 = vrot.lane.b32.xlu0 %v1181, 127
        %v1187 = vpop.permute.xlu0 %1186
        %v1190 = vadd.f32 %v1148, %v1185
        %v1191 = vadd.f32 %v1149, %v1187
        %v1192 = vmul.f32 %v1132, -0.20217688
        %v1193 = vmul.f32 %v1133, -0.20217688
        %1196 = vrot.lane.b32.xlu0 %v1192, 127
        %v1197 = vpop.permute.xlu0 %1196
        %1198 = vrot.lane.b32.xlu0 %v1193, 127
        %v1199 = vpop.permute.xlu0 %1198
        %v1202 = vadd.f32 %v1150, %v1197
        %v1203 = vadd.f32 %v1151, %v1199
        %v1204 = vadd.f32 %v1154, %v1185
        %v1205 = vadd.f32 %v1155, %v1187
        %1208 = vrot.lane.b32.xlu0 %v1138, 126
        %v1209 = vpop.permute.xlu0 %1208
        %1210 = vrot.lane.b32.xlu0 %v1139, 126
        %v1211 = vpop.permute.xlu0 %1210
        %v1214 = vadd.f32 %v1136, %v1209
        %v1215 = vadd.f32 %v1137, %v1211
        %v1216 = vadd.f32 %v1166, %v1209
        %v1217 = vadd.f32 %v1167, %v1211
        %1220 = vrot.lane.b32.xlu0 %v1142, 126
        %v1221 = vpop.permute.xlu0 %1220
        %1222 = vrot.lane.b32.xlu0 %v1143, 126
        %v1223 = vpop.permute.xlu0 %1222
        %v1226 = vadd.f32 %v1178, %v1221
        %v1227 = vadd.f32 %v1179, %v1223
        %1230 = vrot.lane.b32.xlu0 %v1152, 126
        %v1231 = vpop.permute.xlu0 %1230
        %1232 = vrot.lane.b32.xlu0 %v1153, 126
        %v1233 = vpop.permute.xlu0 %1232
        %v1236 = vadd.f32 %v1190, %v1231
        %v1237 = vadd.f32 %v1191, %v1233
        %v1238 = vadd.f32 %v1202, %v1221
        %v1239 = vadd.f32 %v1203, %v1223
        %1242 = vrot.lane.b32.xlu0 %v1146, 126
        %v1243 = vpop.permute.xlu0 %1242
        %1244 = vrot.lane.b32.xlu0 %v1147, 126
        %v1245 = vpop.permute.xlu0 %1244
        %v1248 = vadd.f32 %v1204, %v1243
        %v1249 = vadd.f32 %v1205, %v1245
        %v1250 = vmul.f32 %v1214, %v1214
        %v1251 = vmul.f32 %v1215, %v1215
        %v1252 = vmul.f32 %v1216, %v1216
        %v1253 = vmul.f32 %v1217, %v1217
        %v1254 = vadd.f32 %v1250, %v1252
        %v1255 = vadd.f32 %v1251, %v1253
        %v1256 = vadd.f32 %v1254, 1e-12
        %v1257 = vadd.f32 %v1255, 1e-12
        %v1258 = vrsqrt.pop %v1256
        %v1259 = vmul.f32 %v1256, %v1258
        %vm1260 = vcmp.eq.f32.partialorder %v1256, inf
        %v1261 = vsel %vm1260, %v1256, %v1259
        %vm1262 = vcmp.eq.f32.partialorder %v1256, 0.0
        %v1263 = vand.u32 %v1256, 2147483648
        %v1264 = vsel %vm1262, %v1263, %v1261
        %v1265 = vrsqrt.pop %v1257
        %v1266 = vmul.f32 %v1257, %v1265
        %vm1267 = vcmp.eq.f32.partialorder %v1257, inf
        %v1268 = vsel %vm1267, %v1257, %v1266
        %vm1269 = vcmp.eq.f32.partialorder %v1257, 0.0
        %v1270 = vand.u32 %v1257, 2147483648
        %v1271 = vsel %vm1269, %v1270, %v1268
        %v1272 = vadd.f32 %v924, %v1264
        %v1273 = vadd.f32 %v925, %v1271
        %v1274 = vstv %s230
        %v1275 = vmul.f32 %v1274, %v1226
        %v1276 = vmul.f32 %v1274, %v1227
        %vm1277 = vcmask 130048
        %1278 = vst.msk [vmem:[%s173] sm:$0xff] %vm1277, %v1275
        %1279 = vst.msk [vmem:[%s173 + $0x8] sm:$0xff] %vm1277, %v1276
        %v1280 = vmul.f32 %v1274, %v1236
        %v1281 = vmul.f32 %v1274, %v1237
        %s1282 = scalar_lea.vmem %s173, 16 [#allocation8]
        %1283 = vst.msk [vmem:[%s1282] sm:$0xff] %vm1277, %v1280
        %1284 = vst.msk [vmem:[%s1282 + $0x8] sm:$0xff] %vm1277, %v1281
        %v1285 = vmul.f32 %v1274, %v1238
        %v1286 = vmul.f32 %v1274, %v1239
        %s1287 = scalar_lea.vmem %s173, 32 [#allocation8]
        %1288 = vst.msk [vmem:[%s1287] sm:$0xff] %vm1277, %v1285
        %1289 = vst.msk [vmem:[%s1287 + $0x8] sm:$0xff] %vm1277, %v1286
        %v1290 = vmul.f32 %v1274, %v1248
        %v1291 = vmul.f32 %v1274, %v1249
        %s1292 = scalar_lea.vmem %s173, 48 [#allocation8]
        %1293 = vst.msk [vmem:[%s1292] sm:$0xff] %vm1277, %v1290
        %1294 = vst.msk [vmem:[%s1292 + $0x8] sm:$0xff] %vm1277, %v1291
        %v1295 = vmul.f32 %v1272, 0.33333334
        %v1296 = vmul.f32 %v1273, 0.33333334
        %v1297 = vstv %s231
        %v1298 = vmul.f32 %v1297, %v1295
        %v1299 = vmul.f32 %v1297, %v1296
        %s1300 = scalar_lea.vmem %s173, 64 [#allocation8]
        %1301 = vst.msk [vmem:[%s1300] sm:$0xff] %vm1277, %v1298
        %1302 = vst.msk [vmem:[%s1300 + $0x8] sm:$0xff] %vm1277, %v1299
        %s1303 = sand.u32 %s75, 1
        %s1304 = scalar_lea.sflag [#allocation5], %s1303
        %s1305 = sand.u32 %s75, 1
        %s1306 = smul.addr %s1305, 80
        %s1307 = scalar_lea.vmem [#allocation8], %s1306
        // Predicated region
        $region41: #{tpu_custom_call.1} parent=27 // pred_check
          %p1308 = pneg %p85
        $region42: #{tpu_custom_call.1} parent=27 // pred_check_branch
          %1310 = sbr.rel (%p1308) target = $region44
        $region43: #{tpu_custom_call.1} parent=27 // pred_region
          %s1312 = ssub.s32 1280, 1280
          %1313 = vsyncadd %s1304, %s1312
          %s1314 = smul.addr %s20, 10
          %s1315 = smul.addr %s1314, 128
          %s1316 = scalar_lea.hbm %s2, %s1315
          %s1317 = sshll.u32 %s1307, 4
          %s1318 = int_to_ptr.vmem [resolvable:$true] %s1317
          %1323 = dma.vmem_to_hbm [thread:$0]  %s1318, 1280, %s1316, %s1304, 128, 128, 8
        $region44: #{tpu_custom_call.1} parent=27 // pred_fallthru
          _
      $region28: #{tpu_custom_call.1} parent=5 // pred_fallthru
        _
      %p1324 = scmp.le.s32.totalorder 2, %s15
      // Predicated region
      $region45: #{tpu_custom_call.1} parent=5 // pred_check
        %p1325 = pneg %p1324
      $region46: #{tpu_custom_call.1} parent=5 // pred_check_branch
        %1327 = sbr.rel (%p1325) target = $region48
      $region47: #{tpu_custom_call.1} parent=5 // pred_region
        %s1328 = ssub.s32 %s15, 2
        // Predicated region
        $region49: #{tpu_custom_call.1} parent=47 // pred_check
          %p1329 = pneg %p91
        $region50: #{tpu_custom_call.1} parent=47 // pred_check_branch
          %1331 = sbr.rel (%p1329) target = $region52
        $region51: #{tpu_custom_call.1} parent=47 // pred_region
          %s1332 = sand.u32 %s76, 1
          %s1333 = scalar_lea.sflag [#allocation5], %s1332
          %s1334 = sand.u32 %s76, 1
          %s1335 = smul.addr %s1334, 80
          %s1336 = scalar_lea.vmem [#allocation8], %s1335
          %1337 = dma.done %s1333, 1280
        $region52: #{tpu_custom_call.1} parent=47 // pred_fallthru
          _
      $region48: #{tpu_custom_call.1} parent=5 // pred_fallthru
        _
    $region6: #{tpu_custom_call.1} parent=1 // loop_footer
      %s19 = sadd.s32 1, %s15
    $region7: #{tpu_custom_call.1} parent=1 // loop_footer_branch
      %14 = sbr.rel target = $region3
    $region8: #{tpu_custom_call.1} parent=1 // loop_exit
      _
    %1338 = vsyncpa [#allocation4], 1
    %s1339 = scalar_lea.sflag [#allocation4], 1
    %1340 = vsyncpa %s1339, 1
    %1341 = vsyncpa [#allocation5], 1
    %s1342 = scalar_lea.sflag [#allocation5], 1
    %1343 = vsyncpa %s1342, 1
    %1344 = vsyncpa [#allocation6], 1
    %s1345 = scalar_lea.sflag [#allocation6], 1
    %1346 = vsyncpa %s1345, 1

</llo_original>
